<compile_context>
chip_gen: v7x
topology: tpu7x:2x2x1
jax: 0.10.0
libtpu: 0.0.40
codegen_flags: <defaults>
</compile_context>

<pallas_src>
import jax
import jax.numpy as jnp
from jax.experimental import pallas as pl
from jax.experimental.pallas import tpu as pltpu


# -----------------------------------------------------------------------------
# Pallas kernel (batch-in-lanes / features-in-sublanes layout)
# -----------------------------------------------------------------------------
def _make_forward_kernel(nlayer, N, b_tile, units):
    """refs = [s0T,
               w0_diff, whh0_T, bias0_site0, bias0_rest,
               (wfused_T, bias) per stacked layer,
               wd_diff_col, bd_diff, out]."""

    def kernel(*refs):
        f32 = jnp.float32

        s0_ref = refs[0]                       # (N, b_tile)  one-hot index-0 column
        w0_diff = refs[1][...]                 # (h0, 1)      wih0[0] - wih0[1]
        whh0 = refs[2][...]                    # (h0, h0)     whh0^T: pre = whh0 @ h
        bias0_site0 = refs[3][...]             # (h0, 1)      bih0+bhh0 (zero input)
        bias0_rest = refs[4][...]              # (h0, 1)      bih0+bhh0+wih0[1]
        idx = 5
        stacked = []
        for _ in range(1, nlayer):
            wf = refs[idx][...]                # (h_li, h_{li-1}+h_li)  [wih^T|whh^T]
            bias = refs[idx + 1][...]          # (h_li, 1)
            stacked.append((wf, bias))
            idx += 2
        wd_col = refs[idx][...]                # (h_last, 1)  wd[:,0]-wd[:,1]
        bd = refs[idx + 1][...]                # (1, 1)       bd[0]-bd[1]
        out_ref = refs[idx + 2]                # (1, b_tile)

        # ---- one-time loads & hoisted whole-slab ops -------------------------
        s0 = s0_ref[...]                       # (N, b_tile)
        sgn = 2.0 * s0 - 1.0                   # +1 -> prob[0], -1 -> prob[1]

        hx = [jnp.zeros((units[li], b_tile), f32) for li in range(nlayer)]
        prod = jnp.ones((1, b_tile), f32)

        # N is small & static -> unroll at trace time.
        for i in range(N):
            # ---------- layer 0: recurrent matmul + rank-1 input injection ----
            pre0 = jnp.dot(whh0, hx[0], preferred_element_type=f32)
            if i == 0:
                pre0 = pre0 + bias0_site0      # reference input at site 0 is zero
            else:
                a0 = s0[i - 1:i, :]            # (1, b_tile): 1.0 if prev spin == 0
                pre0 = pre0 + bias0_rest + a0 * w0_diff
            h = jnp.tanh(pre0)
            new_hx = [h]
            x = h

            # ---------- stacked layers >= 1: single fused K-concat matmul -----
            for li in range(1, nlayer):
                wf, bias = stacked[li - 1]
                xin = jnp.concatenate([x, hx[li]], axis=0)   # (h_{li-1}+h_li, bt)
                pre = jnp.dot(wf, xin, preferred_element_type=f32) + bias
                h2 = jnp.tanh(pre)
                new_hx.append(h2)
                x = h2
            hx = new_hx
            rnn_out = hx[-1]                   # (h_last, b_tile)

            # ---------- 2-way softmax + gather == sigmoid of logit difference -
            d = jnp.sum(rnn_out * wd_col, axis=0, keepdims=True) + bd   # (1, bt)
            z = sgn[i:i + 1, :] * d
            p_i = 0.5 * (1.0 + jnp.tanh(0.5 * z))   # == sigmoid(z), EUP tanh
            prod = prod * p_i

        out_ref[...] = prod

    return kernel


# -----------------------------------------------------------------------------
# Wrapper
# -----------------------------------------------------------------------------
def rnn_wavefunction_forward(sample, params, units, *, batch_tile=256):
    """sample: (batch, N, 2) float32 exact one-hot.  Returns P(sigma): (batch, 1)."""
    batch, N, input_dim = sample.shape
    assert input_dim == 2
    nlayer = len(units)

    bt = batch if batch < batch_tile else batch_tile
    if batch % bt != 0:
        raise ValueError("batch must be a multiple of the batch tile")
    num_tiles = batch // bt

    f32 = jnp.float32

    # batch-in-lanes spin slab: one-hot index-0 column, transposed -> (N, batch)
    s0T = jnp.transpose(sample[:, :, 0]).astype(f32)

    flat_args = [s0T]
    in_specs = [pl.BlockSpec((N, bt), lambda i: (0, i))]

    def const_spec(arr):
        return pl.BlockSpec(arr.shape, lambda i: (0, 0))

    # --- layer 0 -------------------------------------------------------------
    wih0, whh0, bih0, bhh0 = params["rnn"][0]              # wih0: (2, h0) (in, out)
    w0_diff = (wih0[0] - wih0[1]).reshape(-1, 1).astype(f32)        # (h0, 1)
    whh0_T = jnp.transpose(whh0).astype(f32)                        # (h0, h0)
    bias0 = (bih0 + bhh0).reshape(-1, 1).astype(f32)                # site 0
    bias0_r = bias0 + wih0[1].reshape(-1, 1).astype(f32)            # sites > 0
    for a in (w0_diff, whh0_T, bias0, bias0_r):
        flat_args.append(a)
        in_specs.append(const_spec(a))

    # --- stacked layers: fused [wih^T | whh^T] weight + fused bias ------------
    for li in range(1, nlayer):
        wih, whh, bih, bhh = params["rnn"][li]             # stored (in, out)
        wf = jnp.concatenate([jnp.transpose(wih), jnp.transpose(whh)],
                             axis=1).astype(f32)           # (h_li, h_{li-1}+h_li)
        bias = (bih + bhh).reshape(-1, 1).astype(f32)      # (h_li, 1)
        for a in (wf, bias):
            flat_args.append(a)
            in_specs.append(const_spec(a))

    # --- output head: softmax+gather folded into a sigmoid of the logit diff --
    wd = params["dense_w"]                                 # (h_last, 2)
    bd = params["dense_b"]                                 # (2,)
    wd_diff = (wd[:, 0] - wd[:, 1]).reshape(-1, 1).astype(f32)      # (h_last, 1)
    bd_diff = jnp.reshape(bd[0] - bd[1], (1, 1)).astype(f32)        # (1, 1)
    for a in (wd_diff, bd_diff):
        flat_args.append(a)
        in_specs.append(const_spec(a))

    kernel = _make_forward_kernel(nlayer, N, bt, units)

    out = pl.pallas_call(
        kernel,
        out_shape=jax.ShapeDtypeStruct((1, batch), f32),   # lane-dense output slab
        grid_spec=pltpu.PrefetchScalarGridSpec(
            num_scalar_prefetch=0,
            grid=(num_tiles,),
            in_specs=in_specs,
            out_specs=pl.BlockSpec((1, bt), lambda i: (0, i)),
        ),
        compiler_params=pltpu.CompilerParams(
            dimension_semantics=("parallel",)),
    )(*flat_args)

    return out.reshape(batch, 1)


# -----------------------------------------------------------------------------
# Deterministic parameter construction (PyTorch-style uniform init)
# -----------------------------------------------------------------------------
def init_params(key, units, input_dim=2):
    params = {"rnn": []}
    in_dim = input_dim
    for h in units:
        k = 1.0 / jnp.sqrt(h)
        key, k1, k2, k3, k4 = jax.random.split(key, 5)
        # stored transposed: (in, out) so the reference step is x @ W
        wih = jax.random.uniform(k1, (in_dim, h), jnp.float32, -k, k)
        whh = jax.random.uniform(k2, (h, h), jnp.float32, -k, k)
        bih = jax.random.uniform(k3, (h,), jnp.float32, -k, k)
        bhh = jax.random.uniform(k4, (h,), jnp.float32, -k, k)
        params["rnn"].append((wih, whh, bih, bhh))
        in_dim = h
    k = 1.0 / jnp.sqrt(units[-1])
    key, k1, k2 = jax.random.split(key, 3)
    params["dense_w"] = jax.random.uniform(k1, (units[-1], 2), jnp.float32, -k, k)
    params["dense_b"] = jax.random.uniform(k2, (2,), jnp.float32, -k, k)
    return params


# -----------------------------------------------------------------------------
# Pure-JAX f32 reference (mirrors the PyTorch forward exactly)
# -----------------------------------------------------------------------------
def reference_forward(sample, params, units):
    batch, N, input_dim = sample.shape
    nlayer = len(units)
    inputs = jnp.zeros((batch, input_dim), jnp.float32)
    hx = [jnp.zeros((batch, units[li]), jnp.float32) for li in range(nlayer)]
    probs = []
    for i in range(N):
        x = inputs
        new_hx = []
        for li in range(nlayer):
            wih, whh, bih, bhh = params["rnn"][li]
            h = jnp.tanh(x @ wih + bih + hx[li] @ whh + bhh)
            new_hx.append(h)
            x = h
        hx = new_hx
        o1 = hx[-1] @ params["dense_w"] + params["dense_b"]
        prob_i = jax.nn.softmax(o1, axis=1)
        probs.append(prob_i)
        inputs = sample[:, i, :]
    _prob = jnp.stack(probs, axis=1)                 # (batch, N, 2)
    p = jnp.einsum("bni->bn", _prob * sample)        # (batch, N)
    return jnp.prod(p, axis=1, keepdims=True)        # (batch, 1)


# -----------------------------------------------------------------------------
if __name__ == "__main__":
    key = jax.random.PRNGKey(0)

    # system_size N=8, units=[32, 32]; batch=256 -> single 256-lane grid step
    N = 8
    units = [32, 32]
    batch = 256

    key, pkey, skey = jax.random.split(key, 3)
    params = init_params(pkey, units)

    # exact one-hot spin samples: (batch, N, 2), float32
    spins = jax.random.bernoulli(skey, 0.5, (batch, N)).astype(jnp.int32)
    sample = jax.nn.one_hot(spins, 2, dtype=jnp.float32)

    out = rnn_wavefunction_forward(sample, params, units)
    out = jax.block_until_ready(out)

    ref = reference_forward(sample, params, units)
    assert out.shape == (batch, 1)
    # all-f32 kernel -> tight agreement with the f32 reference
    assert jnp.allclose(out, ref, rtol=1e-3, atol=1e-8), (out[:4], ref[:4])

    print("KERNEL_OK")
</pallas_src>

<mosaic_0001>
module attributes {stable_mosaic.version = 11 : i64} {
  func.func @kernel(%arg0: i32, %arg1: memref<8x256xf32, #tpu.memory_space<vmem>>, %arg2: memref<32x1xf32, #tpu.memory_space<vmem>>, %arg3: memref<32x32xf32, #tpu.memory_space<vmem>>, %arg4: memref<32x1xf32, #tpu.memory_space<vmem>>, %arg5: memref<32x1xf32, #tpu.memory_space<vmem>>, %arg6: memref<32x64xf32, #tpu.memory_space<vmem>>, %arg7: memref<32x1xf32, #tpu.memory_space<vmem>>, %arg8: memref<32x1xf32, #tpu.memory_space<vmem>>, %arg9: memref<1x1xf32, #tpu.memory_space<vmem>>, %arg10: memref<1x256xf32, #tpu.memory_space<vmem>>) attributes {dimension_semantics = [#tpu.dimension_semantics<parallel>], iteration_bounds = array<i64: 1>, scalar_prefetch = 0 : i64, scratch_operands = 0 : i64, tpu.core_type = #tpu.core_type<tc>, window_params = [{transform_indices = @transform_0, window_bounds = array<i64: 8, 256>}, {pipeline_mode = #tpu.pipeline_mode<synchronous>, transform_indices = @transform_1, window_bounds = array<i64: 32, 1>}, {pipeline_mode = #tpu.pipeline_mode<synchronous>, transform_indices = @transform_2, window_bounds = array<i64: 32, 32>}, {pipeline_mode = #tpu.pipeline_mode<synchronous>, transform_indices = @transform_3, window_bounds = array<i64: 32, 1>}, {pipeline_mode = #tpu.pipeline_mode<synchronous>, transform_indices = @transform_4, window_bounds = array<i64: 32, 1>}, {pipeline_mode = #tpu.pipeline_mode<synchronous>, transform_indices = @transform_5, window_bounds = array<i64: 32, 64>}, {pipeline_mode = #tpu.pipeline_mode<synchronous>, transform_indices = @transform_6, window_bounds = array<i64: 32, 1>}, {pipeline_mode = #tpu.pipeline_mode<synchronous>, transform_indices = @transform_7, window_bounds = array<i64: 32, 1>}, {pipeline_mode = #tpu.pipeline_mode<synchronous>, transform_indices = @transform_8, window_bounds = array<i64: 1, 1>}, {transform_indices = @transform_9, window_bounds = array<i64: 1, 256>}]} {
    %c0 = arith.constant 0 : index
    %c0_0 = arith.constant 0 : index
    %0 = vector.load %arg2[%c0, %c0_0] : memref<32x1xf32, #tpu.memory_space<vmem>>, vector<32x1xf32>
    %c0_1 = arith.constant 0 : index
    %c0_2 = arith.constant 0 : index
    %1 = vector.load %arg3[%c0_1, %c0_2] : memref<32x32xf32, #tpu.memory_space<vmem>>, vector<32x32xf32>
    %c0_3 = arith.constant 0 : index
    %c0_4 = arith.constant 0 : index
    %2 = vector.load %arg4[%c0_3, %c0_4] : memref<32x1xf32, #tpu.memory_space<vmem>>, vector<32x1xf32>
    %c0_5 = arith.constant 0 : index
    %c0_6 = arith.constant 0 : index
    %3 = vector.load %arg5[%c0_5, %c0_6] : memref<32x1xf32, #tpu.memory_space<vmem>>, vector<32x1xf32>
    %c0_7 = arith.constant 0 : index
    %c0_8 = arith.constant 0 : index
    %4 = vector.load %arg6[%c0_7, %c0_8] : memref<32x64xf32, #tpu.memory_space<vmem>>, vector<32x64xf32>
    %c0_9 = arith.constant 0 : index
    %c0_10 = arith.constant 0 : index
    %5 = vector.load %arg7[%c0_9, %c0_10] : memref<32x1xf32, #tpu.memory_space<vmem>>, vector<32x1xf32>
    %c0_11 = arith.constant 0 : index
    %c0_12 = arith.constant 0 : index
    %6 = vector.load %arg8[%c0_11, %c0_12] : memref<32x1xf32, #tpu.memory_space<vmem>>, vector<32x1xf32>
    %c0_13 = arith.constant 0 : index
    %c0_14 = arith.constant 0 : index
    %7 = vector.load %arg9[%c0_13, %c0_14] : memref<1x1xf32, #tpu.memory_space<vmem>>, vector<1x1xf32>
    %c0_15 = arith.constant 0 : index
    %c0_16 = arith.constant 0 : index
    %8 = vector.load %arg1[%c0_15, %c0_16] : memref<8x256xf32, #tpu.memory_space<vmem>>, vector<8x256xf32>
    %cst = arith.constant 2.000000e+00 : f32
    %9 = vector.broadcast %cst : f32 to vector<8x256xf32>
    %10 = arith.mulf %9, %8 : vector<8x256xf32>
    %cst_17 = arith.constant 1.000000e+00 : f32
    %11 = vector.broadcast %cst_17 : f32 to vector<8x256xf32>
    %12 = arith.subf %10, %11 : vector<8x256xf32>
    %cst_18 = arith.constant 0.000000e+00 : f32
    %13 = vector.broadcast %cst_18 : f32 to vector<32x256xf32>
    %cst_19 = arith.constant 0.000000e+00 : f32
    %14 = vector.broadcast %cst_19 : f32 to vector<32x256xf32>
    %cst_20 = arith.constant 1.000000e+00 : f32
    %15 = vector.broadcast %cst_20 : f32 to vector<1x256xf32>
    %cst_21 = arith.constant dense<0.000000e+00> : vector<32x256xf32>
    %16 = tpu.matmul %1, %13, %cst_21 {dimension_numbers = #tpu.dot_dimension_numbers<[1], [0], [0], [1], [0, 0, 1, 1], [], []>} : vector<32x32xf32>, vector<32x256xf32>, vector<32x256xf32> -> vector<32x256xf32>
    %17 = vector.broadcast %2 : vector<32x1xf32> to vector<32x256xf32>
    %18 = arith.addf %16, %17 : vector<32x256xf32>
    %19 = math.tanh %18 : vector<32x256xf32>
    %20 = tpu.concatenate %19, %14 in 0 : vector<32x256xf32>, vector<32x256xf32> -> vector<64x256xf32>
    %cst_22 = arith.constant dense<0.000000e+00> : vector<32x256xf32>
    %21 = tpu.matmul %4, %20, %cst_22 {dimension_numbers = #tpu.dot_dimension_numbers<[1], [0], [0], [1], [0, 0, 1, 1], [], []>} : vector<32x64xf32>, vector<64x256xf32>, vector<32x256xf32> -> vector<32x256xf32>
    %22 = vector.broadcast %5 : vector<32x1xf32> to vector<32x256xf32>
    %23 = arith.addf %21, %22 : vector<32x256xf32>
    %24 = math.tanh %23 : vector<32x256xf32>
    %25 = vector.broadcast %6 : vector<32x1xf32> to vector<32x256xf32>
    %26 = arith.mulf %24, %25 : vector<32x256xf32>
    %cst_23 = arith.constant dense<0.000000e+00> : vector<256xf32>
    %27 = vector.multi_reduction <add>, %26, %cst_23 [0] : vector<32x256xf32> to vector<256xf32>
    %28 = vector.shape_cast %27 : vector<256xf32> to vector<1x256xf32>
    %29 = vector.broadcast %7 : vector<1x1xf32> to vector<1x256xf32>
    %30 = arith.addf %28, %29 : vector<1x256xf32>
    %31 = vector.extract_strided_slice %12 {offsets = [0, 0], sizes = [1, 256], strides = [1, 1]} : vector<8x256xf32> to vector<1x256xf32>
    %32 = arith.mulf %31, %30 : vector<1x256xf32>
    %cst_24 = arith.constant 5.000000e-01 : f32
    %33 = vector.broadcast %cst_24 : f32 to vector<1x256xf32>
    %34 = arith.mulf %33, %32 : vector<1x256xf32>
    %35 = math.tanh %34 : vector<1x256xf32>
    %cst_25 = arith.constant 1.000000e+00 : f32
    %36 = vector.broadcast %cst_25 : f32 to vector<1x256xf32>
    %37 = arith.addf %36, %35 : vector<1x256xf32>
    %cst_26 = arith.constant 5.000000e-01 : f32
    %38 = vector.broadcast %cst_26 : f32 to vector<1x256xf32>
    %39 = arith.mulf %38, %37 : vector<1x256xf32>
    %40 = arith.mulf %15, %39 : vector<1x256xf32>
    %cst_27 = arith.constant dense<0.000000e+00> : vector<32x256xf32>
    %41 = tpu.matmul %1, %19, %cst_27 {dimension_numbers = #tpu.dot_dimension_numbers<[1], [0], [0], [1], [0, 0, 1, 1], [], []>} : vector<32x32xf32>, vector<32x256xf32>, vector<32x256xf32> -> vector<32x256xf32>
    %42 = vector.extract_strided_slice %8 {offsets = [0, 0], sizes = [1, 256], strides = [1, 1]} : vector<8x256xf32> to vector<1x256xf32>
    %43 = vector.broadcast %3 : vector<32x1xf32> to vector<32x256xf32>
    %44 = arith.addf %41, %43 : vector<32x256xf32>
    %45 = vector.broadcast %42 : vector<1x256xf32> to vector<32x256xf32>
    %46 = vector.broadcast %0 : vector<32x1xf32> to vector<32x256xf32>
    %47 = arith.mulf %45, %46 : vector<32x256xf32>
    %48 = arith.addf %44, %47 : vector<32x256xf32>
    %49 = math.tanh %48 : vector<32x256xf32>
    %50 = tpu.concatenate %49, %24 in 0 : vector<32x256xf32>, vector<32x256xf32> -> vector<64x256xf32>
    %cst_28 = arith.constant dense<0.000000e+00> : vector<32x256xf32>
    %51 = tpu.matmul %4, %50, %cst_28 {dimension_numbers = #tpu.dot_dimension_numbers<[1], [0], [0], [1], [0, 0, 1, 1], [], []>} : vector<32x64xf32>, vector<64x256xf32>, vector<32x256xf32> -> vector<32x256xf32>
    %52 = vector.broadcast %5 : vector<32x1xf32> to vector<32x256xf32>
    %53 = arith.addf %51, %52 : vector<32x256xf32>
    %54 = math.tanh %53 : vector<32x256xf32>
    %55 = vector.broadcast %6 : vector<32x1xf32> to vector<32x256xf32>
    %56 = arith.mulf %54, %55 : vector<32x256xf32>
    %cst_29 = arith.constant dense<0.000000e+00> : vector<256xf32>
    %57 = vector.multi_reduction <add>, %56, %cst_29 [0] : vector<32x256xf32> to vector<256xf32>
    %58 = vector.shape_cast %57 : vector<256xf32> to vector<1x256xf32>
    %59 = vector.broadcast %7 : vector<1x1xf32> to vector<1x256xf32>
    %60 = arith.addf %58, %59 : vector<1x256xf32>
    %61 = vector.extract_strided_slice %12 {offsets = [1, 0], sizes = [1, 256], strides = [1, 1]} : vector<8x256xf32> to vector<1x256xf32>
    %62 = arith.mulf %61, %60 : vector<1x256xf32>
    %cst_30 = arith.constant 5.000000e-01 : f32
    %63 = vector.broadcast %cst_30 : f32 to vector<1x256xf32>
    %64 = arith.mulf %63, %62 : vector<1x256xf32>
    %65 = math.tanh %64 : vector<1x256xf32>
    %cst_31 = arith.constant 1.000000e+00 : f32
    %66 = vector.broadcast %cst_31 : f32 to vector<1x256xf32>
    %67 = arith.addf %66, %65 : vector<1x256xf32>
    %cst_32 = arith.constant 5.000000e-01 : f32
    %68 = vector.broadcast %cst_32 : f32 to vector<1x256xf32>
    %69 = arith.mulf %68, %67 : vector<1x256xf32>
    %70 = arith.mulf %40, %69 : vector<1x256xf32>
    %cst_33 = arith.constant dense<0.000000e+00> : vector<32x256xf32>
    %71 = tpu.matmul %1, %49, %cst_33 {dimension_numbers = #tpu.dot_dimension_numbers<[1], [0], [0], [1], [0, 0, 1, 1], [], []>} : vector<32x32xf32>, vector<32x256xf32>, vector<32x256xf32> -> vector<32x256xf32>
    %72 = vector.extract_strided_slice %8 {offsets = [1, 0], sizes = [1, 256], strides = [1, 1]} : vector<8x256xf32> to vector<1x256xf32>
    %73 = vector.broadcast %3 : vector<32x1xf32> to vector<32x256xf32>
    %74 = arith.addf %71, %73 : vector<32x256xf32>
    %75 = vector.broadcast %72 : vector<1x256xf32> to vector<32x256xf32>
    %76 = vector.broadcast %0 : vector<32x1xf32> to vector<32x256xf32>
    %77 = arith.mulf %75, %76 : vector<32x256xf32>
    %78 = arith.addf %74, %77 : vector<32x256xf32>
    %79 = math.tanh %78 : vector<32x256xf32>
    %80 = tpu.concatenate %79, %54 in 0 : vector<32x256xf32>, vector<32x256xf32> -> vector<64x256xf32>
    %cst_34 = arith.constant dense<0.000000e+00> : vector<32x256xf32>
    %81 = tpu.matmul %4, %80, %cst_34 {dimension_numbers = #tpu.dot_dimension_numbers<[1], [0], [0], [1], [0, 0, 1, 1], [], []>} : vector<32x64xf32>, vector<64x256xf32>, vector<32x256xf32> -> vector<32x256xf32>
    %82 = vector.broadcast %5 : vector<32x1xf32> to vector<32x256xf32>
    %83 = arith.addf %81, %82 : vector<32x256xf32>
    %84 = math.tanh %83 : vector<32x256xf32>
    %85 = vector.broadcast %6 : vector<32x1xf32> to vector<32x256xf32>
    %86 = arith.mulf %84, %85 : vector<32x256xf32>
    %cst_35 = arith.constant dense<0.000000e+00> : vector<256xf32>
    %87 = vector.multi_reduction <add>, %86, %cst_35 [0] : vector<32x256xf32> to vector<256xf32>
    %88 = vector.shape_cast %87 : vector<256xf32> to vector<1x256xf32>
    %89 = vector.broadcast %7 : vector<1x1xf32> to vector<1x256xf32>
    %90 = arith.addf %88, %89 : vector<1x256xf32>
    %91 = vector.extract_strided_slice %12 {offsets = [2, 0], sizes = [1, 256], strides = [1, 1]} : vector<8x256xf32> to vector<1x256xf32>
    %92 = arith.mulf %91, %90 : vector<1x256xf32>
    %cst_36 = arith.constant 5.000000e-01 : f32
    %93 = vector.broadcast %cst_36 : f32 to vector<1x256xf32>
    %94 = arith.mulf %93, %92 : vector<1x256xf32>
    %95 = math.tanh %94 : vector<1x256xf32>
    %cst_37 = arith.constant 1.000000e+00 : f32
    %96 = vector.broadcast %cst_37 : f32 to vector<1x256xf32>
    %97 = arith.addf %96, %95 : vector<1x256xf32>
    %cst_38 = arith.constant 5.000000e-01 : f32
    %98 = vector.broadcast %cst_38 : f32 to vector<1x256xf32>
    %99 = arith.mulf %98, %97 : vector<1x256xf32>
    %100 = arith.mulf %70, %99 : vector<1x256xf32>
    %cst_39 = arith.constant dense<0.000000e+00> : vector<32x256xf32>
    %101 = tpu.matmul %1, %79, %cst_39 {dimension_numbers = #tpu.dot_dimension_numbers<[1], [0], [0], [1], [0, 0, 1, 1], [], []>} : vector<32x32xf32>, vector<32x256xf32>, vector<32x256xf32> -> vector<32x256xf32>
    %102 = vector.extract_strided_slice %8 {offsets = [2, 0], sizes = [1, 256], strides = [1, 1]} : vector<8x256xf32> to vector<1x256xf32>
    %103 = vector.broadcast %3 : vector<32x1xf32> to vector<32x256xf32>
    %104 = arith.addf %101, %103 : vector<32x256xf32>
    %105 = vector.broadcast %102 : vector<1x256xf32> to vector<32x256xf32>
    %106 = vector.broadcast %0 : vector<32x1xf32> to vector<32x256xf32>
    %107 = arith.mulf %105, %106 : vector<32x256xf32>
    %108 = arith.addf %104, %107 : vector<32x256xf32>
    %109 = math.tanh %108 : vector<32x256xf32>
    %110 = tpu.concatenate %109, %84 in 0 : vector<32x256xf32>, vector<32x256xf32> -> vector<64x256xf32>
    %cst_40 = arith.constant dense<0.000000e+00> : vector<32x256xf32>
    %111 = tpu.matmul %4, %110, %cst_40 {dimension_numbers = #tpu.dot_dimension_numbers<[1], [0], [0], [1], [0, 0, 1, 1], [], []>} : vector<32x64xf32>, vector<64x256xf32>, vector<32x256xf32> -> vector<32x256xf32>
    %112 = vector.broadcast %5 : vector<32x1xf32> to vector<32x256xf32>
    %113 = arith.addf %111, %112 : vector<32x256xf32>
    %114 = math.tanh %113 : vector<32x256xf32>
    %115 = vector.broadcast %6 : vector<32x1xf32> to vector<32x256xf32>
    %116 = arith.mulf %114, %115 : vector<32x256xf32>
    %cst_41 = arith.constant dense<0.000000e+00> : vector<256xf32>
    %117 = vector.multi_reduction <add>, %116, %cst_41 [0] : vector<32x256xf32> to vector<256xf32>
    %118 = vector.shape_cast %117 : vector<256xf32> to vector<1x256xf32>
    %119 = vector.broadcast %7 : vector<1x1xf32> to vector<1x256xf32>
    %120 = arith.addf %118, %119 : vector<1x256xf32>
    %121 = vector.extract_strided_slice %12 {offsets = [3, 0], sizes = [1, 256], strides = [1, 1]} : vector<8x256xf32> to vector<1x256xf32>
    %122 = arith.mulf %121, %120 : vector<1x256xf32>
    %cst_42 = arith.constant 5.000000e-01 : f32
    %123 = vector.broadcast %cst_42 : f32 to vector<1x256xf32>
    %124 = arith.mulf %123, %122 : vector<1x256xf32>
    %125 = math.tanh %124 : vector<1x256xf32>
    %cst_43 = arith.constant 1.000000e+00 : f32
    %126 = vector.broadcast %cst_43 : f32 to vector<1x256xf32>
    %127 = arith.addf %126, %125 : vector<1x256xf32>
    %cst_44 = arith.constant 5.000000e-01 : f32
    %128 = vector.broadcast %cst_44 : f32 to vector<1x256xf32>
    %129 = arith.mulf %128, %127 : vector<1x256xf32>
    %130 = arith.mulf %100, %129 : vector<1x256xf32>
    %cst_45 = arith.constant dense<0.000000e+00> : vector<32x256xf32>
    %131 = tpu.matmul %1, %109, %cst_45 {dimension_numbers = #tpu.dot_dimension_numbers<[1], [0], [0], [1], [0, 0, 1, 1], [], []>} : vector<32x32xf32>, vector<32x256xf32>, vector<32x256xf32> -> vector<32x256xf32>
    %132 = vector.extract_strided_slice %8 {offsets = [3, 0], sizes = [1, 256], strides = [1, 1]} : vector<8x256xf32> to vector<1x256xf32>
    %133 = vector.broadcast %3 : vector<32x1xf32> to vector<32x256xf32>
    %134 = arith.addf %131, %133 : vector<32x256xf32>
    %135 = vector.broadcast %132 : vector<1x256xf32> to vector<32x256xf32>
    %136 = vector.broadcast %0 : vector<32x1xf32> to vector<32x256xf32>
    %137 = arith.mulf %135, %136 : vector<32x256xf32>
    %138 = arith.addf %134, %137 : vector<32x256xf32>
    %139 = math.tanh %138 : vector<32x256xf32>
    %140 = tpu.concatenate %139, %114 in 0 : vector<32x256xf32>, vector<32x256xf32> -> vector<64x256xf32>
    %cst_46 = arith.constant dense<0.000000e+00> : vector<32x256xf32>
    %141 = tpu.matmul %4, %140, %cst_46 {dimension_numbers = #tpu.dot_dimension_numbers<[1], [0], [0], [1], [0, 0, 1, 1], [], []>} : vector<32x64xf32>, vector<64x256xf32>, vector<32x256xf32> -> vector<32x256xf32>
    %142 = vector.broadcast %5 : vector<32x1xf32> to vector<32x256xf32>
    %143 = arith.addf %141, %142 : vector<32x256xf32>
    %144 = math.tanh %143 : vector<32x256xf32>
    %145 = vector.broadcast %6 : vector<32x1xf32> to vector<32x256xf32>
    %146 = arith.mulf %144, %145 : vector<32x256xf32>
    %cst_47 = arith.constant dense<0.000000e+00> : vector<256xf32>
    %147 = vector.multi_reduction <add>, %146, %cst_47 [0] : vector<32x256xf32> to vector<256xf32>
    %148 = vector.shape_cast %147 : vector<256xf32> to vector<1x256xf32>
    %149 = vector.broadcast %7 : vector<1x1xf32> to vector<1x256xf32>
    %150 = arith.addf %148, %149 : vector<1x256xf32>
    %151 = vector.extract_strided_slice %12 {offsets = [4, 0], sizes = [1, 256], strides = [1, 1]} : vector<8x256xf32> to vector<1x256xf32>
    %152 = arith.mulf %151, %150 : vector<1x256xf32>
    %cst_48 = arith.constant 5.000000e-01 : f32
    %153 = vector.broadcast %cst_48 : f32 to vector<1x256xf32>
    %154 = arith.mulf %153, %152 : vector<1x256xf32>
    %155 = math.tanh %154 : vector<1x256xf32>
    %cst_49 = arith.constant 1.000000e+00 : f32
    %156 = vector.broadcast %cst_49 : f32 to vector<1x256xf32>
    %157 = arith.addf %156, %155 : vector<1x256xf32>
    %cst_50 = arith.constant 5.000000e-01 : f32
    %158 = vector.broadcast %cst_50 : f32 to vector<1x256xf32>
    %159 = arith.mulf %158, %157 : vector<1x256xf32>
    %160 = arith.mulf %130, %159 : vector<1x256xf32>
    %cst_51 = arith.constant dense<0.000000e+00> : vector<32x256xf32>
    %161 = tpu.matmul %1, %139, %cst_51 {dimension_numbers = #tpu.dot_dimension_numbers<[1], [0], [0], [1], [0, 0, 1, 1], [], []>} : vector<32x32xf32>, vector<32x256xf32>, vector<32x256xf32> -> vector<32x256xf32>
    %162 = vector.extract_strided_slice %8 {offsets = [4, 0], sizes = [1, 256], strides = [1, 1]} : vector<8x256xf32> to vector<1x256xf32>
    %163 = vector.broadcast %3 : vector<32x1xf32> to vector<32x256xf32>
    %164 = arith.addf %161, %163 : vector<32x256xf32>
    %165 = vector.broadcast %162 : vector<1x256xf32> to vector<32x256xf32>
    %166 = vector.broadcast %0 : vector<32x1xf32> to vector<32x256xf32>
    %167 = arith.mulf %165, %166 : vector<32x256xf32>
    %168 = arith.addf %164, %167 : vector<32x256xf32>
    %169 = math.tanh %168 : vector<32x256xf32>
    %170 = tpu.concatenate %169, %144 in 0 : vector<32x256xf32>, vector<32x256xf32> -> vector<64x256xf32>
    %cst_52 = arith.constant dense<0.000000e+00> : vector<32x256xf32>
    %171 = tpu.matmul %4, %170, %cst_52 {dimension_numbers = #tpu.dot_dimension_numbers<[1], [0], [0], [1], [0, 0, 1, 1], [], []>} : vector<32x64xf32>, vector<64x256xf32>, vector<32x256xf32> -> vector<32x256xf32>
    %172 = vector.broadcast %5 : vector<32x1xf32> to vector<32x256xf32>
    %173 = arith.addf %171, %172 : vector<32x256xf32>
    %174 = math.tanh %173 : vector<32x256xf32>
    %175 = vector.broadcast %6 : vector<32x1xf32> to vector<32x256xf32>
    %176 = arith.mulf %174, %175 : vector<32x256xf32>
    %cst_53 = arith.constant dense<0.000000e+00> : vector<256xf32>
    %177 = vector.multi_reduction <add>, %176, %cst_53 [0] : vector<32x256xf32> to vector<256xf32>
    %178 = vector.shape_cast %177 : vector<256xf32> to vector<1x256xf32>
    %179 = vector.broadcast %7 : vector<1x1xf32> to vector<1x256xf32>
    %180 = arith.addf %178, %179 : vector<1x256xf32>
    %181 = vector.extract_strided_slice %12 {offsets = [5, 0], sizes = [1, 256], strides = [1, 1]} : vector<8x256xf32> to vector<1x256xf32>
    %182 = arith.mulf %181, %180 : vector<1x256xf32>
    %cst_54 = arith.constant 5.000000e-01 : f32
    %183 = vector.broadcast %cst_54 : f32 to vector<1x256xf32>
    %184 = arith.mulf %183, %182 : vector<1x256xf32>
    %185 = math.tanh %184 : vector<1x256xf32>
    %cst_55 = arith.constant 1.000000e+00 : f32
    %186 = vector.broadcast %cst_55 : f32 to vector<1x256xf32>
    %187 = arith.addf %186, %185 : vector<1x256xf32>
    %cst_56 = arith.constant 5.000000e-01 : f32
    %188 = vector.broadcast %cst_56 : f32 to vector<1x256xf32>
    %189 = arith.mulf %188, %187 : vector<1x256xf32>
    %190 = arith.mulf %160, %189 : vector<1x256xf32>
    %cst_57 = arith.constant dense<0.000000e+00> : vector<32x256xf32>
    %191 = tpu.matmul %1, %169, %cst_57 {dimension_numbers = #tpu.dot_dimension_numbers<[1], [0], [0], [1], [0, 0, 1, 1], [], []>} : vector<32x32xf32>, vector<32x256xf32>, vector<32x256xf32> -> vector<32x256xf32>
    %192 = vector.extract_strided_slice %8 {offsets = [5, 0], sizes = [1, 256], strides = [1, 1]} : vector<8x256xf32> to vector<1x256xf32>
    %193 = vector.broadcast %3 : vector<32x1xf32> to vector<32x256xf32>
    %194 = arith.addf %191, %193 : vector<32x256xf32>
    %195 = vector.broadcast %192 : vector<1x256xf32> to vector<32x256xf32>
    %196 = vector.broadcast %0 : vector<32x1xf32> to vector<32x256xf32>
    %197 = arith.mulf %195, %196 : vector<32x256xf32>
    %198 = arith.addf %194, %197 : vector<32x256xf32>
    %199 = math.tanh %198 : vector<32x256xf32>
    %200 = tpu.concatenate %199, %174 in 0 : vector<32x256xf32>, vector<32x256xf32> -> vector<64x256xf32>
    %cst_58 = arith.constant dense<0.000000e+00> : vector<32x256xf32>
    %201 = tpu.matmul %4, %200, %cst_58 {dimension_numbers = #tpu.dot_dimension_numbers<[1], [0], [0], [1], [0, 0, 1, 1], [], []>} : vector<32x64xf32>, vector<64x256xf32>, vector<32x256xf32> -> vector<32x256xf32>
    %202 = vector.broadcast %5 : vector<32x1xf32> to vector<32x256xf32>
    %203 = arith.addf %201, %202 : vector<32x256xf32>
    %204 = math.tanh %203 : vector<32x256xf32>
    %205 = vector.broadcast %6 : vector<32x1xf32> to vector<32x256xf32>
    %206 = arith.mulf %204, %205 : vector<32x256xf32>
    %cst_59 = arith.constant dense<0.000000e+00> : vector<256xf32>
    %207 = vector.multi_reduction <add>, %206, %cst_59 [0] : vector<32x256xf32> to vector<256xf32>
    %208 = vector.shape_cast %207 : vector<256xf32> to vector<1x256xf32>
    %209 = vector.broadcast %7 : vector<1x1xf32> to vector<1x256xf32>
    %210 = arith.addf %208, %209 : vector<1x256xf32>
    %211 = vector.extract_strided_slice %12 {offsets = [6, 0], sizes = [1, 256], strides = [1, 1]} : vector<8x256xf32> to vector<1x256xf32>
    %212 = arith.mulf %211, %210 : vector<1x256xf32>
    %cst_60 = arith.constant 5.000000e-01 : f32
    %213 = vector.broadcast %cst_60 : f32 to vector<1x256xf32>
    %214 = arith.mulf %213, %212 : vector<1x256xf32>
    %215 = math.tanh %214 : vector<1x256xf32>
    %cst_61 = arith.constant 1.000000e+00 : f32
    %216 = vector.broadcast %cst_61 : f32 to vector<1x256xf32>
    %217 = arith.addf %216, %215 : vector<1x256xf32>
    %cst_62 = arith.constant 5.000000e-01 : f32
    %218 = vector.broadcast %cst_62 : f32 to vector<1x256xf32>
    %219 = arith.mulf %218, %217 : vector<1x256xf32>
    %220 = arith.mulf %190, %219 : vector<1x256xf32>
    %cst_63 = arith.constant dense<0.000000e+00> : vector<32x256xf32>
    %221 = tpu.matmul %1, %199, %cst_63 {dimension_numbers = #tpu.dot_dimension_numbers<[1], [0], [0], [1], [0, 0, 1, 1], [], []>} : vector<32x32xf32>, vector<32x256xf32>, vector<32x256xf32> -> vector<32x256xf32>
    %222 = vector.extract_strided_slice %8 {offsets = [6, 0], sizes = [1, 256], strides = [1, 1]} : vector<8x256xf32> to vector<1x256xf32>
    %223 = vector.broadcast %3 : vector<32x1xf32> to vector<32x256xf32>
    %224 = arith.addf %221, %223 : vector<32x256xf32>
    %225 = vector.broadcast %222 : vector<1x256xf32> to vector<32x256xf32>
    %226 = vector.broadcast %0 : vector<32x1xf32> to vector<32x256xf32>
    %227 = arith.mulf %225, %226 : vector<32x256xf32>
    %228 = arith.addf %224, %227 : vector<32x256xf32>
    %229 = math.tanh %228 : vector<32x256xf32>
    %230 = tpu.concatenate %229, %204 in 0 : vector<32x256xf32>, vector<32x256xf32> -> vector<64x256xf32>
    %cst_64 = arith.constant dense<0.000000e+00> : vector<32x256xf32>
    %231 = tpu.matmul %4, %230, %cst_64 {dimension_numbers = #tpu.dot_dimension_numbers<[1], [0], [0], [1], [0, 0, 1, 1], [], []>} : vector<32x64xf32>, vector<64x256xf32>, vector<32x256xf32> -> vector<32x256xf32>
    %232 = vector.broadcast %5 : vector<32x1xf32> to vector<32x256xf32>
    %233 = arith.addf %231, %232 : vector<32x256xf32>
    %234 = math.tanh %233 : vector<32x256xf32>
    %235 = vector.broadcast %6 : vector<32x1xf32> to vector<32x256xf32>
    %236 = arith.mulf %234, %235 : vector<32x256xf32>
    %cst_65 = arith.constant dense<0.000000e+00> : vector<256xf32>
    %237 = vector.multi_reduction <add>, %236, %cst_65 [0] : vector<32x256xf32> to vector<256xf32>
    %238 = vector.shape_cast %237 : vector<256xf32> to vector<1x256xf32>
    %239 = vector.broadcast %7 : vector<1x1xf32> to vector<1x256xf32>
    %240 = arith.addf %238, %239 : vector<1x256xf32>
    %241 = vector.extract_strided_slice %12 {offsets = [7, 0], sizes = [1, 256], strides = [1, 1]} : vector<8x256xf32> to vector<1x256xf32>
    %242 = arith.mulf %241, %240 : vector<1x256xf32>
    %cst_66 = arith.constant 5.000000e-01 : f32
    %243 = vector.broadcast %cst_66 : f32 to vector<1x256xf32>
    %244 = arith.mulf %243, %242 : vector<1x256xf32>
    %245 = math.tanh %244 : vector<1x256xf32>
    %cst_67 = arith.constant 1.000000e+00 : f32
    %246 = vector.broadcast %cst_67 : f32 to vector<1x256xf32>
    %247 = arith.addf %246, %245 : vector<1x256xf32>
    %cst_68 = arith.constant 5.000000e-01 : f32
    %248 = vector.broadcast %cst_68 : f32 to vector<1x256xf32>
    %249 = arith.mulf %248, %247 : vector<1x256xf32>
    %250 = arith.mulf %220, %249 : vector<1x256xf32>
    %c0_69 = arith.constant 0 : index
    %c0_70 = arith.constant 0 : index
    %251 = vector.load %arg10[%c0_69, %c0_70] : memref<1x256xf32, #tpu.memory_space<vmem>>, vector<1x256xf32>
    tpu.vector_store %arg10[%c0_69, %c0_70], %250 {strides = array<i32>} : memref<1x256xf32, #tpu.memory_space<vmem>>, vector<1x256xf32>,
    return
  }
  func.func @transform_0(%arg0: i32) -> (i32, i32) {
    %c0_i32 = arith.constant 0 : i32
    %c0_i32_0 = arith.constant 0 : i32
    return %c0_i32, %arg0 : i32, i32
  }
  func.func @transform_1(%arg0: i32) -> (i32, i32) {
    %c0_i32 = arith.constant 0 : i32
    %c0_i32_0 = arith.constant 0 : i32
    %c0_i32_1 = arith.constant 0 : i32
    return %c0_i32, %c0_i32_0 : i32, i32
  }
  func.func @transform_2(%arg0: i32) -> (i32, i32) {
    %c0_i32 = arith.constant 0 : i32
    %c0_i32_0 = arith.constant 0 : i32
    %c0_i32_1 = arith.constant 0 : i32
    return %c0_i32, %c0_i32_0 : i32, i32
  }
  func.func @transform_3(%arg0: i32) -> (i32, i32) {
    %c0_i32 = arith.constant 0 : i32
    %c0_i32_0 = arith.constant 0 : i32
    %c0_i32_1 = arith.constant 0 : i32
    return %c0_i32, %c0_i32_0 : i32, i32
  }
  func.func @transform_4(%arg0: i32) -> (i32, i32) {
    %c0_i32 = arith.constant 0 : i32
    %c0_i32_0 = arith.constant 0 : i32
    %c0_i32_1 = arith.constant 0 : i32
    return %c0_i32, %c0_i32_0 : i32, i32
  }
  func.func @transform_5(%arg0: i32) -> (i32, i32) {
    %c0_i32 = arith.constant 0 : i32
    %c0_i32_0 = arith.constant 0 : i32
    %c0_i32_1 = arith.constant 0 : i32
    return %c0_i32, %c0_i32_0 : i32, i32
  }
  func.func @transform_6(%arg0: i32) -> (i32, i32) {
    %c0_i32 = arith.constant 0 : i32
    %c0_i32_0 = arith.constant 0 : i32
    %c0_i32_1 = arith.constant 0 : i32
    return %c0_i32, %c0_i32_0 : i32, i32
  }
  func.func @transform_7(%arg0: i32) -> (i32, i32) {
    %c0_i32 = arith.constant 0 : i32
    %c0_i32_0 = arith.constant 0 : i32
    %c0_i32_1 = arith.constant 0 : i32
    return %c0_i32, %c0_i32_0 : i32, i32
  }
  func.func @transform_8(%arg0: i32) -> (i32, i32) {
    %c0_i32 = arith.constant 0 : i32
    %c0_i32_0 = arith.constant 0 : i32
    %c0_i32_1 = arith.constant 0 : i32
    return %c0_i32, %c0_i32_0 : i32, i32
  }
  func.func @transform_9(%arg0: i32) -> (i32, i32) {
    %c0_i32 = arith.constant 0 : i32
    %c0_i32_0 = arith.constant 0 : i32
    return %c0_i32, %arg0 : i32, i32
  }
}

</mosaic_0001>

<llo_original>
// kernel: tpu_custom_call.1
$region0: #{tpu_custom_call.1}
  #allocation0 [shape = 'u32[]', space=smem, size = 0x4, offset = 0x4, fixed_abs, tag = 'smem constant byte address 0x4 - core index']
  #allocation1 [shape = 'u32[144,128]{1,0:T(1,128)}', space=vmem, size = 0x12000, scoped, tag = 'internal scratch']
  #allocation2 [shape = 'f32[1,1]{1,0:T(1,128)S(1)}', space=vmem, size = 0x200, scoped, tag = 'scoped memory for tpu_custom_call.1']
  %s0 = inlined_call_operand.vmem [shape: f32[8,256], index: 0, kind: input, shape index: {}]
  %s1 = inlined_call_operand.vmem [shape: f32[32,1], index: 1, kind: input, shape index: {}]
  %s2 = inlined_call_operand.vmem [shape: f32[32,32], index: 2, kind: input, shape index: {}]
  %s3 = inlined_call_operand.vmem [shape: f32[32,1], index: 3, kind: input, shape index: {}]
  %s4 = inlined_call_operand.vmem [shape: f32[32,1], index: 4, kind: input, shape index: {}]
  %s5 = inlined_call_operand.vmem [shape: f32[32,64], index: 5, kind: input, shape index: {}]
  %s6 = inlined_call_operand.vmem [shape: f32[32,1], index: 6, kind: input, shape index: {}]
  %s7 = inlined_call_operand.vmem [shape: f32[32,1], index: 7, kind: input, shape index: {}]
  %s8 = inlined_call_operand.<no memory space> [shape: f32[1,1], index: 8, kind: input, shape index: {}]
  %s9 = inlined_call_operand.hbm [shape: f32[1,256], index: 9, kind: output, shape index: {}]
  %s10 = sld [smem:[#allocation0]]
  $region46: #{tpu_custom_call.1} parent=0
    _
  %s12 = ssub.s32 1, %s10
  %s13 = scalar_select 0, %s12, %s10
  %v14 = vstv %s8
  %15 = vst [vmem:[#allocation2] sm:$0x1] %v14
  $region1: #{tpu_custom_call.1} parent=0
    #allocation3 [shape = 'u8[1024]{0}', space=vmem, size = 0x400, scoped, tag = 'output window, operand 0, single buffered']
    #allocation4 [shape = 's32[1]{0}', space=sflag, size = 0x4, scoped, tag = 'scoped memory for tpu_custom_call.1']
    %16 = vsyncpa [#allocation4], 0
    // Predicated region
    $region2: #{tpu_custom_call.1} parent=1 // pred_check
      _
    $region3: #{tpu_custom_call.1} parent=1 // pred_check_branch
      %18 = sbr.rel (0) target = $region5
    $region4: #{tpu_custom_call.1} parent=1 // pred_region
      _
    $region5: #{tpu_custom_call.1} parent=1 // pred_fallthru
      _
    // Predicated region
    $region6: #{tpu_custom_call.1} parent=1 // pred_check
      _
    $region7: #{tpu_custom_call.1} parent=1 // pred_check_branch
      %20 = sbr.rel (0) target = $region9
    $region8: #{tpu_custom_call.1} parent=1 // pred_region
      _
    $region9: #{tpu_custom_call.1} parent=1 // pred_fallthru
      _
    // Predicated region
    $region10: #{tpu_custom_call.1} parent=1 // pred_check
      _
    $region11: #{tpu_custom_call.1} parent=1 // pred_check_branch
      %22 = sbr.rel (0) target = $region13
    $region12: #{tpu_custom_call.1} parent=1 // pred_region
      _
    $region13: #{tpu_custom_call.1} parent=1 // pred_fallthru
      _
    // Predicated region
    $region14: #{tpu_custom_call.1} parent=1 // pred_check
      _
    $region15: #{tpu_custom_call.1} parent=1 // pred_check_branch
      %24 = sbr.rel (0) target = $region17
    $region16: #{tpu_custom_call.1} parent=1 // pred_region
      _
    $region17: #{tpu_custom_call.1} parent=1 // pred_fallthru
      _
    // Predicated region
    $region18: #{tpu_custom_call.1} parent=1 // pred_check
      _
    $region19: #{tpu_custom_call.1} parent=1 // pred_check_branch
      %26 = sbr.rel (0) target = $region21
    $region20: #{tpu_custom_call.1} parent=1 // pred_region
      _
    $region21: #{tpu_custom_call.1} parent=1 // pred_fallthru
      _
    // Predicated region
    $region22: #{tpu_custom_call.1} parent=1 // pred_check
      _
    $region23: #{tpu_custom_call.1} parent=1 // pred_check_branch
      %28 = sbr.rel (0) target = $region25
    $region24: #{tpu_custom_call.1} parent=1 // pred_region
      _
    $region25: #{tpu_custom_call.1} parent=1 // pred_fallthru
      _
    // Predicated region
    $region26: #{tpu_custom_call.1} parent=1 // pred_check
      _
    $region27: #{tpu_custom_call.1} parent=1 // pred_check_branch
      %30 = sbr.rel (0) target = $region29
    $region28: #{tpu_custom_call.1} parent=1 // pred_region
      _
    $region29: #{tpu_custom_call.1} parent=1 // pred_fallthru
      _
    // Predicated region
    $region30: #{tpu_custom_call.1} parent=1 // pred_check
      _
    $region31: #{tpu_custom_call.1} parent=1 // pred_check_branch
      %32 = sbr.rel (0) target = $region33
    $region32: #{tpu_custom_call.1} parent=1 // pred_region
      _
    $region33: #{tpu_custom_call.1} parent=1 // pred_fallthru
      _
    // Predicated region
    $region34: #{tpu_custom_call.1} parent=1 // pred_check
      _
    $region35: #{tpu_custom_call.1} parent=1 // pred_check_branch
      %34 = sbr.rel (0) target = $region37
    $region36: #{tpu_custom_call.1} parent=1 // pred_region
      _
    $region37: #{tpu_custom_call.1} parent=1 // pred_fallthru
      _
    %v35 = vld [vmem:[%s1] sm:$0xff]
    %v36 = vld [vmem:[%s1 + $0x8] sm:$0xff]
    %v37 = vld [vmem:[%s1 + $0x10] sm:$0xff]
    %v38 = vld [vmem:[%s1 + $0x18] sm:$0xff]
    %v39 = vld [vmem:[%s2] sm:$0xff]
    %v40 = vld [vmem:[%s2 + $0x8] sm:$0xff]
    %v41 = vld [vmem:[%s2 + $0x10] sm:$0xff]
    %v42 = vld [vmem:[%s2 + $0x18] sm:$0xff]
    %v43 = vld [vmem:[%s3] sm:$0xff]
    %v44 = vld [vmem:[%s3 + $0x8] sm:$0xff]
    %v45 = vld [vmem:[%s3 + $0x10] sm:$0xff]
    %v46 = vld [vmem:[%s3 + $0x18] sm:$0xff]
    %v47 = vld [vmem:[%s4] sm:$0xff]
    %v48 = vld [vmem:[%s4 + $0x8] sm:$0xff]
    %v49 = vld [vmem:[%s4 + $0x10] sm:$0xff]
    %v50 = vld [vmem:[%s4 + $0x18] sm:$0xff]
    %v51 = vld [vmem:[%s5] sm:$0xff]
    %v52 = vld [vmem:[%s5 + $0x8] sm:$0xff]
    %v53 = vld [vmem:[%s5 + $0x10] sm:$0xff]
    %v54 = vld [vmem:[%s5 + $0x18] sm:$0xff]
    %v55 = vld [vmem:[%s6] sm:$0xff]
    %v56 = vld [vmem:[%s6 + $0x8] sm:$0xff]
    %v57 = vld [vmem:[%s6 + $0x10] sm:$0xff]
    %v58 = vld [vmem:[%s6 + $0x18] sm:$0xff]
    %v59 = vld [vmem:[%s7] sm:$0xff]
    %v60 = vld [vmem:[%s7 + $0x8] sm:$0xff]
    %v61 = vld [vmem:[%s7 + $0x10] sm:$0xff]
    %v62 = vld [vmem:[%s7 + $0x18] sm:$0xff]
    %v63 = vld [vmem:[#allocation2] sm:$0x1]
    %v64 = vld [vmem:[%s0] sm:$0xff]
    %v65 = vld [vmem:[%s0 + $0x8] sm:$0xff]
    %v66 = vmul.f32 %v64, 2.0
    %v67 = vmul.f32 %v65, 2.0
    %v68 = vsub.f32 %v66, 1.0
    %v69 = vsub.f32 %v67, 1.0
    %71 = vset.pattern.permute.xlu0 0
    %72 = vperm.xlu0 %71, %v43
    %v73 = vpop.permute.xlu0 %72
    %76 = vset.pattern.permute.xlu0 0
    %77 = vperm.xlu0 %76, %v44
    %v78 = vpop.permute.xlu0 %77
    %81 = vset.pattern.permute.xlu0 0
    %82 = vperm.xlu0 %81, %v45
    %v83 = vpop.permute.xlu0 %82
    %86 = vset.pattern.permute.xlu0 0
    %87 = vperm.xlu0 %86, %v46
    %v88 = vpop.permute.xlu0 %87
    %vm90 = vcmask 261120
    %v92 = vsel %vm90, %v39, 0
    %v95 = vsel %vm90, %v40, 0
    %v98 = vsel %vm90, %v41, 0
    %v101 = vsel %vm90, %v42, 0
    %103 = vmatprep.subr.mxu0 0.0
    %104 = vmatpush1.msra.mxu0 0.0
    %105 = vmatprep.subr.mxu0 0.0
    %106 = vmatpush1.msra.mxu0 0.0
    %107 = vmatprep.subr.mxu0 0.0
    %108 = vmatpush1.msra.mxu0 0.0
    %109 = vmatprep.subr.mxu0 0.0
    %110 = vmatpush1.msra.mxu0 0.0
    %111 = vmatprep.subr.mxu0 0.0
    %112 = vmatpush1.msra.mxu0 0.0
    %113 = vmatprep.subr.mxu0 0.0
    %114 = vmatpush1.msra.mxu0 0.0
    %115 = vmatprep.subr.mxu0 0.0
    %116 = vmatpush1.msra.mxu0 0.0
    %117 = vmatprep.subr.mxu0 0.0
    %118 = vmatpush1.msra.mxu0 0.0
    %119 = vmatprep.subr.mxu0 0.0
    %120 = vmatpush1.msra.mxu0 0.0
    %121 = vmatprep.subr.mxu0 0.0
    %122 = vmatpush1.msra.mxu0 0.0
    %123 = vmatprep.subr.mxu0 0.0
    %124 = vmatpush1.msra.mxu0 0.0
    %125 = vmatprep.subr.mxu0 0.0
    %126 = vmatpush1.msra.mxu0 0.0
    %127 = vmatprep.subr.mxu0 0.0
    %128 = vmatpush1.msra.mxu0 0.0
    %129 = vmatprep.subr.mxu0 0.0
    %130 = vmatpush1.msra.mxu0 0.0
    %131 = vmatprep.subr.mxu0 0.0
    %132 = vmatpush1.msra.mxu0 0.0
    %133 = vmatprep.subr.mxu0 0.0
    %134 = vmatpush1.msra.mxu0 0.0
    %135 = vmatprep.subr.mxu0 0.0
    %136 = vmatpush1.msra.mxu0 0.0
    %137 = vmatprep.subr.mxu0 0.0
    %138 = vmatpush1.msra.mxu0 0.0
    %139 = vmatprep.subr.mxu0 0.0
    %140 = vmatpush1.msra.mxu0 0.0
    %141 = vmatprep.subr.mxu0 0.0
    %142 = vmatpush1.msra.mxu0 0.0
    %143 = vmatprep.subr.mxu0 0.0
    %144 = vmatpush1.msra.mxu0 0.0
    %145 = vmatprep.subr.mxu0 0.0
    %146 = vmatpush1.msra.mxu0 0.0
    %147 = vmatprep.subr.mxu0 0.0
    %148 = vmatpush1.msra.mxu0 0.0
    %149 = vmatprep.subr.mxu0 0.0
    %150 = vmatpush1.msra.mxu0 0.0
    %151 = vmatprep.subr.mxu0 0.0
    %152 = vmatpush1.msra.mxu0 0.0
    %153 = vmatprep.subr.mxu0 0.0
    %154 = vmatpush1.msra.mxu0 0.0
    %155 = vmatprep.subr.mxu0 0.0
    %156 = vmatpush1.msra.mxu0 0.0
    %157 = vmatprep.subr.mxu0 0.0
    %158 = vmatpush1.msra.mxu0 0.0
    %159 = vmatprep.subr.mxu0 0.0
    %160 = vmatpush1.msra.mxu0 0.0
    %161 = vmatprep.subr.mxu0 0.0
    %162 = vmatpush1.msra.mxu0 0.0
    %163 = vmatprep.subr.mxu0 0.0
    %164 = vmatpush1.msra.mxu0 0.0
    %165 = vmatprep.subr.mxu0 0.0
    %166 = vmatpush1.msra.mxu0 0.0
    %167 = vmatprep.mubr.f32.mxu0 0.0
    %168 = vmatmul.mubr.f32.gmra.mrb[0].mxu0 %v92
    %v169 = vpop.f32.mrb[0].mxu0
    %v170 = vadd.f32 %v73, %v169
    %v171 = vpop.f32.mrb[0].mxu0
    %v172 = vadd.f32 %v73, %v171
    %173 = vmatprep.mubr.f32.mxu0 0.0
    %174 = vmatmul.mubr.f32.gmra.mrb[0].mxu0 %v95
    %v175 = vpop.f32.mrb[0].mxu0
    %v176 = vadd.f32 %v78, %v175
    %v177 = vpop.f32.mrb[0].mxu0
    %v178 = vadd.f32 %v78, %v177
    %179 = vmatprep.mubr.f32.mxu0 0.0
    %180 = vmatmul.mubr.f32.gmra.mrb[0].mxu0 %v98
    %v181 = vpop.f32.mrb[0].mxu0
    %v182 = vadd.f32 %v83, %v181
    %v183 = vpop.f32.mrb[0].mxu0
    %v184 = vadd.f32 %v83, %v183
    %185 = vmatprep.mubr.f32.mxu0 0.0
    %186 = vmatmul.mubr.f32.gmra.mrb[0].mxu0 %v101
    %v187 = vpop.f32.mrb[0].mxu0
    %v188 = vadd.f32 %v88, %v187
    %v189 = vpop.f32.mrb[0].mxu0
    %v190 = vadd.f32 %v88, %v189
    %191 = vdwg.mxu0
    %v192 = vtanh.pop %v170
    %v193 = vtanh.pop %v172
    %v194 = vtanh.pop %v176
    %v195 = vtanh.pop %v178
    %v196 = vtanh.pop %v182
    %v197 = vtanh.pop %v184
    %v198 = vtanh.pop %v188
    %v199 = vtanh.pop %v190
    %201 = vset.pattern.permute.xlu0 0
    %202 = vperm.xlu0 %201, %v55
    %v203 = vpop.permute.xlu0 %202
    %206 = vset.pattern.permute.xlu0 0
    %207 = vperm.xlu0 %206, %v56
    %v208 = vpop.permute.xlu0 %207
    %211 = vset.pattern.permute.xlu0 0
    %212 = vperm.xlu0 %211, %v57
    %v213 = vpop.permute.xlu0 %212
    %216 = vset.pattern.permute.xlu0 0
    %217 = vperm.xlu0 %216, %v58
    %v218 = vpop.permute.xlu0 %217
    %vm220 = vcmask 523264
    %v222 = vsel %vm220, %v51, 0
    %v225 = vsel %vm220, %v52, 0
    %v228 = vsel %vm220, %v53, 0
    %v231 = vsel %vm220, %v54, 0
    %233 = vmatprep.subr.mxu0 %v193
    %234 = vmatpush1.msra.mxu0 %v192
    %235 = vmatprep.subr.mxu0 %v195
    %236 = vmatpush1.msra.mxu0 %v194
    %237 = vmatprep.subr.mxu0 %v197
    %238 = vmatpush1.msra.mxu0 %v196
    %239 = vmatprep.subr.mxu0 %v199
    %240 = vmatpush1.msra.mxu0 %v198
    %241 = vmatprep.subr.mxu0 0.0
    %242 = vmatpush1.msra.mxu0 0.0
    %243 = vmatprep.subr.mxu0 0.0
    %244 = vmatpush1.msra.mxu0 0.0
    %245 = vmatprep.subr.mxu0 0.0
    %246 = vmatpush1.msra.mxu0 0.0
    %247 = vmatprep.subr.mxu0 0.0
    %248 = vmatpush1.msra.mxu0 0.0
    %249 = vmatprep.subr.mxu0 0.0
    %250 = vmatpush1.msra.mxu0 0.0
    %251 = vmatprep.subr.mxu0 0.0
    %252 = vmatpush1.msra.mxu0 0.0
    %253 = vmatprep.subr.mxu0 0.0
    %254 = vmatpush1.msra.mxu0 0.0
    %255 = vmatprep.subr.mxu0 0.0
    %256 = vmatpush1.msra.mxu0 0.0
    %257 = vmatprep.subr.mxu0 0.0
    %258 = vmatpush1.msra.mxu0 0.0
    %259 = vmatprep.subr.mxu0 0.0
    %260 = vmatpush1.msra.mxu0 0.0
    %261 = vmatprep.subr.mxu0 0.0
    %262 = vmatpush1.msra.mxu0 0.0
    %263 = vmatprep.subr.mxu0 0.0
    %264 = vmatpush1.msra.mxu0 0.0
    %265 = vmatprep.subr.mxu0 0.0
    %266 = vmatpush1.msra.mxu0 0.0
    %267 = vmatprep.subr.mxu0 0.0
    %268 = vmatpush1.msra.mxu0 0.0
    %269 = vmatprep.subr.mxu0 0.0
    %270 = vmatpush1.msra.mxu0 0.0
    %271 = vmatprep.subr.mxu0 0.0
    %272 = vmatpush1.msra.mxu0 0.0
    %273 = vmatprep.subr.mxu0 0.0
    %274 = vmatpush1.msra.mxu0 0.0
    %275 = vmatprep.subr.mxu0 0.0
    %276 = vmatpush1.msra.mxu0 0.0
    %277 = vmatprep.subr.mxu0 0.0
    %278 = vmatpush1.msra.mxu0 0.0
    %279 = vmatprep.subr.mxu0 0.0
    %280 = vmatpush1.msra.mxu0 0.0
    %281 = vmatprep.subr.mxu0 0.0
    %282 = vmatpush1.msra.mxu0 0.0
    %283 = vmatprep.subr.mxu0 0.0
    %284 = vmatpush1.msra.mxu0 0.0
    %285 = vmatprep.subr.mxu0 0.0
    %286 = vmatpush1.msra.mxu0 0.0
    %287 = vmatprep.subr.mxu0 0.0
    %288 = vmatpush1.msra.mxu0 0.0
    %289 = vmatprep.subr.mxu0 0.0
    %290 = vmatpush1.msra.mxu0 0.0
    %291 = vmatprep.subr.mxu0 0.0
    %292 = vmatpush1.msra.mxu0 0.0
    %293 = vmatprep.subr.mxu0 0.0
    %294 = vmatpush1.msra.mxu0 0.0
    %295 = vmatprep.subr.mxu0 0.0
    %296 = vmatpush1.msra.mxu0 0.0
    %297 = vmatprep.mubr.f32.mxu0 0.0
    %298 = vmatmul.mubr.f32.gmra.mrb[0].mxu0 %v222
    %v299 = vpop.f32.mrb[0].mxu0
    %v300 = vadd.f32 %v203, %v299
    %v301 = vpop.f32.mrb[0].mxu0
    %v302 = vadd.f32 %v203, %v301
    %303 = vmatprep.mubr.f32.mxu0 0.0
    %304 = vmatmul.mubr.f32.gmra.mrb[0].mxu0 %v225
    %v305 = vpop.f32.mrb[0].mxu0
    %v306 = vadd.f32 %v208, %v305
    %v307 = vpop.f32.mrb[0].mxu0
    %v308 = vadd.f32 %v208, %v307
    %309 = vmatprep.mubr.f32.mxu0 0.0
    %310 = vmatmul.mubr.f32.gmra.mrb[0].mxu0 %v228
    %v311 = vpop.f32.mrb[0].mxu0
    %v312 = vadd.f32 %v213, %v311
    %v313 = vpop.f32.mrb[0].mxu0
    %v314 = vadd.f32 %v213, %v313
    %315 = vmatprep.mubr.f32.mxu0 0.0
    %316 = vmatmul.mubr.f32.gmra.mrb[0].mxu0 %v231
    %v317 = vpop.f32.mrb[0].mxu0
    %v318 = vadd.f32 %v218, %v317
    %v319 = vpop.f32.mrb[0].mxu0
    %v320 = vadd.f32 %v218, %v319
    %321 = vdwg.mxu0
    %v322 = vtanh.pop %v300
    %v323 = vtanh.pop %v302
    %v324 = vtanh.pop %v306
    %v325 = vtanh.pop %v308
    %v326 = vtanh.pop %v312
    %v327 = vtanh.pop %v314
    %v328 = vtanh.pop %v318
    %v329 = vtanh.pop %v320
    %331 = vset.pattern.permute.xlu0 0
    %332 = vperm.xlu0 %331, %v59
    %v333 = vpop.permute.xlu0 %332
    %336 = vset.pattern.permute.xlu0 0
    %337 = vperm.xlu0 %336, %v60
    %v338 = vpop.permute.xlu0 %337
    %341 = vset.pattern.permute.xlu0 0
    %342 = vperm.xlu0 %341, %v61
    %v343 = vpop.permute.xlu0 %342
    %346 = vset.pattern.permute.xlu0 0
    %347 = vperm.xlu0 %346, %v62
    %v348 = vpop.permute.xlu0 %347
    %v350 = vmul.f32 %v322, %v333
    %v351 = vmul.f32 %v323, %v333
    %v352 = vmul.f32 %v324, %v338
    %v353 = vmul.f32 %v325, %v338
    %v354 = vmul.f32 %v326, %v343
    %v355 = vmul.f32 %v327, %v343
    %v356 = vmul.f32 %v328, %v348
    %v357 = vmul.f32 %v329, %v348
    %v358 = vadd.f32 %v350, %v352
    %v359 = vadd.f32 %v358, %v354
    %v360 = vadd.f32 %v359, %v356
    %v361 = vrot.slane %v360, 4
    %v362 = vadd.f32 %v360, %v361
    %v363 = vrot.slane %v362, 2
    %v364 = vadd.f32 %v362, %v363
    %v365 = vrot.slane %v364, 1
    %v366 = vadd.f32 %v364, %v365
    %v367 = vadd.f32 %v351, %v353
    %v368 = vadd.f32 %v367, %v355
    %v369 = vadd.f32 %v368, %v357
    %v370 = vrot.slane %v369, 4
    %v371 = vadd.f32 %v369, %v370
    %v372 = vrot.slane %v371, 2
    %v373 = vadd.f32 %v371, %v372
    %v374 = vrot.slane %v373, 1
    %v375 = vadd.f32 %v373, %v374
    %377 = vset.pattern.permute.xlu0 0
    %378 = vperm.xlu0 %377, %v63
    %v379 = vpop.permute.xlu0 %378
    %v381 = vlaneseq
    %v382 = vshrl.u32 %v381, 7
    %v383 = vsub.s32 0, %v382
    %v384 = vrot.slane %v379, %v383
    %v385 = vadd.f32 %v366, %v384
    %v386 = vadd.f32 %v375, %v384
    %v387 = vmul.f32 %v68, %v385
    %v388 = vmul.f32 %v69, %v386
    %v389 = vmul.f32 %v387, 0.5
    %v390 = vmul.f32 %v388, 0.5
    %v391 = vtanh.pop %v389
    %v392 = vtanh.pop %v390
    %v393 = vadd.f32 %v391, 1.0
    %v394 = vadd.f32 %v392, 1.0
    %v395 = vmul.f32 %v393, 0.5
    %v396 = vmul.f32 %v394, 0.5
    %398 = vset.pattern.permute.xlu0 0
    %399 = vperm.xlu0 %398, %v47
    %v400 = vpop.permute.xlu0 %399
    %403 = vset.pattern.permute.xlu0 0
    %404 = vperm.xlu0 %403, %v48
    %v405 = vpop.permute.xlu0 %404
    %408 = vset.pattern.permute.xlu0 0
    %409 = vperm.xlu0 %408, %v49
    %v410 = vpop.permute.xlu0 %409
    %413 = vset.pattern.permute.xlu0 0
    %414 = vperm.xlu0 %413, %v50
    %v415 = vpop.permute.xlu0 %414
    %417 = vmatprep.subr.mxu0 %v193
    %418 = vmatpush1.msra.mxu0 %v192
    %419 = vmatprep.subr.mxu0 %v195
    %420 = vmatpush1.msra.mxu0 %v194
    %421 = vmatprep.subr.mxu0 %v197
    %422 = vmatpush1.msra.mxu0 %v196
    %423 = vmatprep.subr.mxu0 %v199
    %424 = vmatpush1.msra.mxu0 %v198
    %425 = vmatprep.subr.mxu0 0.0
    %426 = vmatpush1.msra.mxu0 0.0
    %427 = vmatprep.subr.mxu0 0.0
    %428 = vmatpush1.msra.mxu0 0.0
    %429 = vmatprep.subr.mxu0 0.0
    %430 = vmatpush1.msra.mxu0 0.0
    %431 = vmatprep.subr.mxu0 0.0
    %432 = vmatpush1.msra.mxu0 0.0
    %433 = vmatprep.subr.mxu0 0.0
    %434 = vmatpush1.msra.mxu0 0.0
    %435 = vmatprep.subr.mxu0 0.0
    %436 = vmatpush1.msra.mxu0 0.0
    %437 = vmatprep.subr.mxu0 0.0
    %438 = vmatpush1.msra.mxu0 0.0
    %439 = vmatprep.subr.mxu0 0.0
    %440 = vmatpush1.msra.mxu0 0.0
    %441 = vmatprep.subr.mxu0 0.0
    %442 = vmatpush1.msra.mxu0 0.0
    %443 = vmatprep.subr.mxu0 0.0
    %444 = vmatpush1.msra.mxu0 0.0
    %445 = vmatprep.subr.mxu0 0.0
    %446 = vmatpush1.msra.mxu0 0.0
    %447 = vmatprep.subr.mxu0 0.0
    %448 = vmatpush1.msra.mxu0 0.0
    %449 = vmatprep.subr.mxu0 0.0
    %450 = vmatpush1.msra.mxu0 0.0
    %451 = vmatprep.subr.mxu0 0.0
    %452 = vmatpush1.msra.mxu0 0.0
    %453 = vmatprep.subr.mxu0 0.0
    %454 = vmatpush1.msra.mxu0 0.0
    %455 = vmatprep.subr.mxu0 0.0
    %456 = vmatpush1.msra.mxu0 0.0
    %457 = vmatprep.subr.mxu0 0.0
    %458 = vmatpush1.msra.mxu0 0.0
    %459 = vmatprep.subr.mxu0 0.0
    %460 = vmatpush1.msra.mxu0 0.0
    %461 = vmatprep.subr.mxu0 0.0
    %462 = vmatpush1.msra.mxu0 0.0
    %463 = vmatprep.subr.mxu0 0.0
    %464 = vmatpush1.msra.mxu0 0.0
    %465 = vmatprep.subr.mxu0 0.0
    %466 = vmatpush1.msra.mxu0 0.0
    %467 = vmatprep.subr.mxu0 0.0
    %468 = vmatpush1.msra.mxu0 0.0
    %469 = vmatprep.subr.mxu0 0.0
    %470 = vmatpush1.msra.mxu0 0.0
    %471 = vmatprep.subr.mxu0 0.0
    %472 = vmatpush1.msra.mxu0 0.0
    %473 = vmatprep.subr.mxu0 0.0
    %474 = vmatpush1.msra.mxu0 0.0
    %475 = vmatprep.subr.mxu0 0.0
    %476 = vmatpush1.msra.mxu0 0.0
    %477 = vmatprep.subr.mxu0 0.0
    %478 = vmatpush1.msra.mxu0 0.0
    %479 = vmatprep.subr.mxu0 0.0
    %480 = vmatpush1.msra.mxu0 0.0
    %481 = vmatprep.mubr.f32.mxu0 0.0
    %482 = vmatmul.mubr.f32.gmra.mrb[0].mxu0 %v92
    %v483 = vpop.f32.mrb[0].mxu0
    %v484 = vadd.f32 %v400, %v483
    %v485 = vpop.f32.mrb[0].mxu0
    %v486 = vadd.f32 %v400, %v485
    %487 = vmatprep.mubr.f32.mxu0 0.0
    %488 = vmatmul.mubr.f32.gmra.mrb[0].mxu0 %v95
    %v489 = vpop.f32.mrb[0].mxu0
    %v490 = vadd.f32 %v405, %v489
    %v491 = vpop.f32.mrb[0].mxu0
    %v492 = vadd.f32 %v405, %v491
    %493 = vmatprep.mubr.f32.mxu0 0.0
    %494 = vmatmul.mubr.f32.gmra.mrb[0].mxu0 %v98
    %v495 = vpop.f32.mrb[0].mxu0
    %v496 = vadd.f32 %v410, %v495
    %v497 = vpop.f32.mrb[0].mxu0
    %v498 = vadd.f32 %v410, %v497
    %499 = vmatprep.mubr.f32.mxu0 0.0
    %500 = vmatmul.mubr.f32.gmra.mrb[0].mxu0 %v101
    %v501 = vpop.f32.mrb[0].mxu0
    %v502 = vadd.f32 %v415, %v501
    %v503 = vpop.f32.mrb[0].mxu0
    %v504 = vadd.f32 %v415, %v503
    %505 = vdwg.mxu0
    %v506 = vlaneseq
    %v507 = vshrl.u32 %v506, 7
    %v508 = vsub.s32 0, %v507
    %v509 = vrot.slane %v64, %v508
    %v510 = vlaneseq
    %v511 = vshrl.u32 %v510, 7
    %v512 = vsub.s32 0, %v511
    %v513 = vrot.slane %v65, %v512
    %515 = vset.pattern.permute.xlu0 0
    %516 = vperm.xlu0 %515, %v35
    %v517 = vpop.permute.xlu0 %516
    %520 = vset.pattern.permute.xlu0 0
    %521 = vperm.xlu0 %520, %v36
    %v522 = vpop.permute.xlu0 %521
    %525 = vset.pattern.permute.xlu0 0
    %526 = vperm.xlu0 %525, %v37
    %v527 = vpop.permute.xlu0 %526
    %530 = vset.pattern.permute.xlu0 0
    %531 = vperm.xlu0 %530, %v38
    %v532 = vpop.permute.xlu0 %531
    %v534 = vmul.f32 %v509, %v517
    %v535 = vmul.f32 %v513, %v517
    %v536 = vmul.f32 %v509, %v522
    %v537 = vmul.f32 %v513, %v522
    %v538 = vmul.f32 %v509, %v527
    %v539 = vmul.f32 %v513, %v527
    %v540 = vmul.f32 %v509, %v532
    %v541 = vmul.f32 %v513, %v532
    %v542 = vadd.f32 %v484, %v534
    %v543 = vadd.f32 %v486, %v535
    %v544 = vadd.f32 %v490, %v536
    %v545 = vadd.f32 %v492, %v537
    %v546 = vadd.f32 %v496, %v538
    %v547 = vadd.f32 %v498, %v539
    %v548 = vadd.f32 %v502, %v540
    %v549 = vadd.f32 %v504, %v541
    %v550 = vtanh.pop %v542
    %v551 = vtanh.pop %v543
    %v552 = vtanh.pop %v544
    %v553 = vtanh.pop %v545
    %v554 = vtanh.pop %v546
    %v555 = vtanh.pop %v547
    %v556 = vtanh.pop %v548
    %v557 = vtanh.pop %v549
    %558 = vmatprep.subr.mxu0 %v551
    %559 = vmatpush1.msra.mxu0 %v550
    %560 = vmatprep.subr.mxu0 %v553
    %561 = vmatpush1.msra.mxu0 %v552
    %562 = vmatprep.subr.mxu0 %v555
    %563 = vmatpush1.msra.mxu0 %v554
    %564 = vmatprep.subr.mxu0 %v557
    %565 = vmatpush1.msra.mxu0 %v556
    %566 = vmatprep.subr.mxu0 %v323
    %567 = vmatpush1.msra.mxu0 %v322
    %568 = vmatprep.subr.mxu0 %v325
    %569 = vmatpush1.msra.mxu0 %v324
    %570 = vmatprep.subr.mxu0 %v327
    %571 = vmatpush1.msra.mxu0 %v326
    %572 = vmatprep.subr.mxu0 %v329
    %573 = vmatpush1.msra.mxu0 %v328
    %574 = vmatprep.subr.mxu0 0.0
    %575 = vmatpush1.msra.mxu0 0.0
    %576 = vmatprep.subr.mxu0 0.0
    %577 = vmatpush1.msra.mxu0 0.0
    %578 = vmatprep.subr.mxu0 0.0
    %579 = vmatpush1.msra.mxu0 0.0
    %580 = vmatprep.subr.mxu0 0.0
    %581 = vmatpush1.msra.mxu0 0.0
    %582 = vmatprep.subr.mxu0 0.0
    %583 = vmatpush1.msra.mxu0 0.0
    %584 = vmatprep.subr.mxu0 0.0
    %585 = vmatpush1.msra.mxu0 0.0
    %586 = vmatprep.subr.mxu0 0.0
    %587 = vmatpush1.msra.mxu0 0.0
    %588 = vmatprep.subr.mxu0 0.0
    %589 = vmatpush1.msra.mxu0 0.0
    %590 = vmatprep.subr.mxu0 0.0
    %591 = vmatpush1.msra.mxu0 0.0
    %592 = vmatprep.subr.mxu0 0.0
    %593 = vmatpush1.msra.mxu0 0.0
    %594 = vmatprep.subr.mxu0 0.0
    %595 = vmatpush1.msra.mxu0 0.0
    %596 = vmatprep.subr.mxu0 0.0
    %597 = vmatpush1.msra.mxu0 0.0
    %598 = vmatprep.subr.mxu0 0.0
    %599 = vmatpush1.msra.mxu0 0.0
    %600 = vmatprep.subr.mxu0 0.0
    %601 = vmatpush1.msra.mxu0 0.0
    %602 = vmatprep.subr.mxu0 0.0
    %603 = vmatpush1.msra.mxu0 0.0
    %604 = vmatprep.subr.mxu0 0.0
    %605 = vmatpush1.msra.mxu0 0.0
    %606 = vmatprep.subr.mxu0 0.0
    %607 = vmatpush1.msra.mxu0 0.0
    %608 = vmatprep.subr.mxu0 0.0
    %609 = vmatpush1.msra.mxu0 0.0
    %610 = vmatprep.subr.mxu0 0.0
    %611 = vmatpush1.msra.mxu0 0.0
    %612 = vmatprep.subr.mxu0 0.0
    %613 = vmatpush1.msra.mxu0 0.0
    %614 = vmatprep.subr.mxu0 0.0
    %615 = vmatpush1.msra.mxu0 0.0
    %616 = vmatprep.subr.mxu0 0.0
    %617 = vmatpush1.msra.mxu0 0.0
    %618 = vmatprep.subr.mxu0 0.0
    %619 = vmatpush1.msra.mxu0 0.0
    %620 = vmatprep.subr.mxu0 0.0
    %621 = vmatpush1.msra.mxu0 0.0
    %622 = vmatprep.mubr.f32.mxu0 0.0
    %623 = vmatmul.mubr.f32.gmra.mrb[0].mxu0 %v222
    %v624 = vpop.f32.mrb[0].mxu0
    %v625 = vadd.f32 %v203, %v624
    %v626 = vpop.f32.mrb[0].mxu0
    %v627 = vadd.f32 %v203, %v626
    %628 = vmatprep.mubr.f32.mxu0 0.0
    %629 = vmatmul.mubr.f32.gmra.mrb[0].mxu0 %v225
    %v630 = vpop.f32.mrb[0].mxu0
    %v631 = vadd.f32 %v208, %v630
    %v632 = vpop.f32.mrb[0].mxu0
    %v633 = vadd.f32 %v208, %v632
    %634 = vmatprep.mubr.f32.mxu0 0.0
    %635 = vmatmul.mubr.f32.gmra.mrb[0].mxu0 %v228
    %v636 = vpop.f32.mrb[0].mxu0
    %v637 = vadd.f32 %v213, %v636
    %v638 = vpop.f32.mrb[0].mxu0
    %v639 = vadd.f32 %v213, %v638
    %640 = vmatprep.mubr.f32.mxu0 0.0
    %641 = vmatmul.mubr.f32.gmra.mrb[0].mxu0 %v231
    %v642 = vpop.f32.mrb[0].mxu0
    %v643 = vadd.f32 %v218, %v642
    %v644 = vpop.f32.mrb[0].mxu0
    %v645 = vadd.f32 %v218, %v644
    %646 = vdwg.mxu0
    %v647 = vtanh.pop %v625
    %v648 = vtanh.pop %v627
    %v649 = vtanh.pop %v631
    %v650 = vtanh.pop %v633
    %v651 = vtanh.pop %v637
    %v652 = vtanh.pop %v639
    %v653 = vtanh.pop %v643
    %v654 = vtanh.pop %v645
    %v655 = vmul.f32 %v647, %v333
    %v656 = vmul.f32 %v648, %v333
    %v657 = vmul.f32 %v649, %v338
    %v658 = vmul.f32 %v650, %v338
    %v659 = vmul.f32 %v651, %v343
    %v660 = vmul.f32 %v652, %v343
    %v661 = vmul.f32 %v653, %v348
    %v662 = vmul.f32 %v654, %v348
    %v663 = vadd.f32 %v655, %v657
    %v664 = vadd.f32 %v663, %v659
    %v665 = vadd.f32 %v664, %v661
    %v666 = vrot.slane %v665, 4
    %v667 = vadd.f32 %v665, %v666
    %v668 = vrot.slane %v667, 2
    %v669 = vadd.f32 %v667, %v668
    %v670 = vrot.slane %v669, 1
    %v671 = vadd.f32 %v669, %v670
    %v672 = vadd.f32 %v656, %v658
    %v673 = vadd.f32 %v672, %v660
    %v674 = vadd.f32 %v673, %v662
    %v675 = vrot.slane %v674, 4
    %v676 = vadd.f32 %v674, %v675
    %v677 = vrot.slane %v676, 2
    %v678 = vadd.f32 %v676, %v677
    %v679 = vrot.slane %v678, 1
    %v680 = vadd.f32 %v678, %v679
    %v681 = vadd.f32 %v671, %v384
    %v682 = vadd.f32 %v680, %v384
    %v683 = vmul.f32 %v68, %v681
    %v684 = vmul.f32 %v69, %v682
    %v685 = vmul.f32 %v683, 0.5
    %v686 = vmul.f32 %v684, 0.5
    %v687 = vtanh.pop %v685
    %v688 = vtanh.pop %v686
    %v689 = vadd.f32 %v687, 1.0
    %v690 = vadd.f32 %v688, 1.0
    %v691 = vmul.f32 %v689, 0.5
    %v692 = vmul.f32 %v690, 0.5
    %v695 = vrot.slane %v691, 1
    %v696 = vrot.slane %v692, 1
    %v699 = vmul.f32 %v395, %v695
    %v700 = vmul.f32 %v396, %v696
    %701 = vmatprep.subr.mxu0 %v551
    %702 = vmatpush1.msra.mxu0 %v550
    %703 = vmatprep.subr.mxu0 %v553
    %704 = vmatpush1.msra.mxu0 %v552
    %705 = vmatprep.subr.mxu0 %v555
    %706 = vmatpush1.msra.mxu0 %v554
    %707 = vmatprep.subr.mxu0 %v557
    %708 = vmatpush1.msra.mxu0 %v556
    %709 = vmatprep.subr.mxu0 0.0
    %710 = vmatpush1.msra.mxu0 0.0
    %711 = vmatprep.subr.mxu0 0.0
    %712 = vmatpush1.msra.mxu0 0.0
    %713 = vmatprep.subr.mxu0 0.0
    %714 = vmatpush1.msra.mxu0 0.0
    %715 = vmatprep.subr.mxu0 0.0
    %716 = vmatpush1.msra.mxu0 0.0
    %717 = vmatprep.subr.mxu0 0.0
    %718 = vmatpush1.msra.mxu0 0.0
    %719 = vmatprep.subr.mxu0 0.0
    %720 = vmatpush1.msra.mxu0 0.0
    %721 = vmatprep.subr.mxu0 0.0
    %722 = vmatpush1.msra.mxu0 0.0
    %723 = vmatprep.subr.mxu0 0.0
    %724 = vmatpush1.msra.mxu0 0.0
    %725 = vmatprep.subr.mxu0 0.0
    %726 = vmatpush1.msra.mxu0 0.0
    %727 = vmatprep.subr.mxu0 0.0
    %728 = vmatpush1.msra.mxu0 0.0
    %729 = vmatprep.subr.mxu0 0.0
    %730 = vmatpush1.msra.mxu0 0.0
    %731 = vmatprep.subr.mxu0 0.0
    %732 = vmatpush1.msra.mxu0 0.0
    %733 = vmatprep.subr.mxu0 0.0
    %734 = vmatpush1.msra.mxu0 0.0
    %735 = vmatprep.subr.mxu0 0.0
    %736 = vmatpush1.msra.mxu0 0.0
    %737 = vmatprep.subr.mxu0 0.0
    %738 = vmatpush1.msra.mxu0 0.0
    %739 = vmatprep.subr.mxu0 0.0
    %740 = vmatpush1.msra.mxu0 0.0
    %741 = vmatprep.subr.mxu0 0.0
    %742 = vmatpush1.msra.mxu0 0.0
    %743 = vmatprep.subr.mxu0 0.0
    %744 = vmatpush1.msra.mxu0 0.0
    %745 = vmatprep.subr.mxu0 0.0
    %746 = vmatpush1.msra.mxu0 0.0
    %747 = vmatprep.subr.mxu0 0.0
    %748 = vmatpush1.msra.mxu0 0.0
    %749 = vmatprep.subr.mxu0 0.0
    %750 = vmatpush1.msra.mxu0 0.0
    %751 = vmatprep.subr.mxu0 0.0
    %752 = vmatpush1.msra.mxu0 0.0
    %753 = vmatprep.subr.mxu0 0.0
    %754 = vmatpush1.msra.mxu0 0.0
    %755 = vmatprep.subr.mxu0 0.0
    %756 = vmatpush1.msra.mxu0 0.0
    %757 = vmatprep.subr.mxu0 0.0
    %758 = vmatpush1.msra.mxu0 0.0
    %759 = vmatprep.subr.mxu0 0.0
    %760 = vmatpush1.msra.mxu0 0.0
    %761 = vmatprep.subr.mxu0 0.0
    %762 = vmatpush1.msra.mxu0 0.0
    %763 = vmatprep.subr.mxu0 0.0
    %764 = vmatpush1.msra.mxu0 0.0
    %765 = vmatprep.mubr.f32.mxu0 0.0
    %766 = vmatmul.mubr.f32.gmra.mrb[0].mxu0 %v92
    %v767 = vpop.f32.mrb[0].mxu0
    %v768 = vadd.f32 %v400, %v767
    %v769 = vpop.f32.mrb[0].mxu0
    %v770 = vadd.f32 %v400, %v769
    %771 = vmatprep.mubr.f32.mxu0 0.0
    %772 = vmatmul.mubr.f32.gmra.mrb[0].mxu0 %v95
    %v773 = vpop.f32.mrb[0].mxu0
    %v774 = vadd.f32 %v405, %v773
    %v775 = vpop.f32.mrb[0].mxu0
    %v776 = vadd.f32 %v405, %v775
    %777 = vmatprep.mubr.f32.mxu0 0.0
    %778 = vmatmul.mubr.f32.gmra.mrb[0].mxu0 %v98
    %v779 = vpop.f32.mrb[0].mxu0
    %v780 = vadd.f32 %v410, %v779
    %v781 = vpop.f32.mrb[0].mxu0
    %v782 = vadd.f32 %v410, %v781
    %783 = vmatprep.mubr.f32.mxu0 0.0
    %784 = vmatmul.mubr.f32.gmra.mrb[0].mxu0 %v101
    %v785 = vpop.f32.mrb[0].mxu0
    %v786 = vadd.f32 %v415, %v785
    %v787 = vpop.f32.mrb[0].mxu0
    %v788 = vadd.f32 %v415, %v787
    %789 = vdwg.mxu0
    %v790 = vlaneseq
    %v791 = vshrl.u32 %v790, 7
    %v792 = vsub.s32 1, %v791
    %v793 = vrot.slane %v64, %v792
    %v794 = vlaneseq
    %v795 = vshrl.u32 %v794, 7
    %v796 = vsub.s32 1, %v795
    %v797 = vrot.slane %v65, %v796
    %v798 = vmul.f32 %v793, %v517
    %v799 = vmul.f32 %v797, %v517
    %v800 = vmul.f32 %v793, %v522
    %v801 = vmul.f32 %v797, %v522
    %v802 = vmul.f32 %v793, %v527
    %v803 = vmul.f32 %v797, %v527
    %v804 = vmul.f32 %v793, %v532
    %v805 = vmul.f32 %v797, %v532
    %v806 = vadd.f32 %v768, %v798
    %v807 = vadd.f32 %v770, %v799
    %v808 = vadd.f32 %v774, %v800
    %v809 = vadd.f32 %v776, %v801
    %v810 = vadd.f32 %v780, %v802
    %v811 = vadd.f32 %v782, %v803
    %v812 = vadd.f32 %v786, %v804
    %v813 = vadd.f32 %v788, %v805
    %v814 = vtanh.pop %v806
    %v815 = vtanh.pop %v807
    %v816 = vtanh.pop %v808
    %v817 = vtanh.pop %v809
    %v818 = vtanh.pop %v810
    %v819 = vtanh.pop %v811
    %v820 = vtanh.pop %v812
    %v821 = vtanh.pop %v813
    %822 = vmatprep.subr.mxu0 %v815
    %823 = vmatpush1.msra.mxu0 %v814
    %824 = vmatprep.subr.mxu0 %v817
    %825 = vmatpush1.msra.mxu0 %v816
    %826 = vmatprep.subr.mxu0 %v819
    %827 = vmatpush1.msra.mxu0 %v818
    %828 = vmatprep.subr.mxu0 %v821
    %829 = vmatpush1.msra.mxu0 %v820
    %830 = vmatprep.subr.mxu0 %v648
    %831 = vmatpush1.msra.mxu0 %v647
    %832 = vmatprep.subr.mxu0 %v650
    %833 = vmatpush1.msra.mxu0 %v649
    %834 = vmatprep.subr.mxu0 %v652
    %835 = vmatpush1.msra.mxu0 %v651
    %836 = vmatprep.subr.mxu0 %v654
    %837 = vmatpush1.msra.mxu0 %v653
    %838 = vmatprep.subr.mxu0 0.0
    %839 = vmatpush1.msra.mxu0 0.0
    %840 = vmatprep.subr.mxu0 0.0
    %841 = vmatpush1.msra.mxu0 0.0
    %842 = vmatprep.subr.mxu0 0.0
    %843 = vmatpush1.msra.mxu0 0.0
    %844 = vmatprep.subr.mxu0 0.0
    %845 = vmatpush1.msra.mxu0 0.0
    %846 = vmatprep.subr.mxu0 0.0
    %847 = vmatpush1.msra.mxu0 0.0
    %848 = vmatprep.subr.mxu0 0.0
    %849 = vmatpush1.msra.mxu0 0.0
    %850 = vmatprep.subr.mxu0 0.0
    %851 = vmatpush1.msra.mxu0 0.0
    %852 = vmatprep.subr.mxu0 0.0
    %853 = vmatpush1.msra.mxu0 0.0
    %854 = vmatprep.subr.mxu0 0.0
    %855 = vmatpush1.msra.mxu0 0.0
    %856 = vmatprep.subr.mxu0 0.0
    %857 = vmatpush1.msra.mxu0 0.0
    %858 = vmatprep.subr.mxu0 0.0
    %859 = vmatpush1.msra.mxu0 0.0
    %860 = vmatprep.subr.mxu0 0.0
    %861 = vmatpush1.msra.mxu0 0.0
    %862 = vmatprep.subr.mxu0 0.0
    %863 = vmatpush1.msra.mxu0 0.0
    %864 = vmatprep.subr.mxu0 0.0
    %865 = vmatpush1.msra.mxu0 0.0
    %866 = vmatprep.subr.mxu0 0.0
    %867 = vmatpush1.msra.mxu0 0.0
    %868 = vmatprep.subr.mxu0 0.0
    %869 = vmatpush1.msra.mxu0 0.0
    %870 = vmatprep.subr.mxu0 0.0
    %871 = vmatpush1.msra.mxu0 0.0
    %872 = vmatprep.subr.mxu0 0.0
    %873 = vmatpush1.msra.mxu0 0.0
    %874 = vmatprep.subr.mxu0 0.0
    %875 = vmatpush1.msra.mxu0 0.0
    %876 = vmatprep.subr.mxu0 0.0
    %877 = vmatpush1.msra.mxu0 0.0
    %878 = vmatprep.subr.mxu0 0.0
    %879 = vmatpush1.msra.mxu0 0.0
    %880 = vmatprep.subr.mxu0 0.0
    %881 = vmatpush1.msra.mxu0 0.0
    %882 = vmatprep.subr.mxu0 0.0
    %883 = vmatpush1.msra.mxu0 0.0
    %884 = vmatprep.subr.mxu0 0.0
    %885 = vmatpush1.msra.mxu0 0.0
    %886 = vmatprep.mubr.f32.mxu0 0.0
    %887 = vmatmul.mubr.f32.gmra.mrb[0].mxu0 %v222
    %v888 = vpop.f32.mrb[0].mxu0
    %v889 = vadd.f32 %v203, %v888
    %v890 = vpop.f32.mrb[0].mxu0
    %v891 = vadd.f32 %v203, %v890
    %892 = vmatprep.mubr.f32.mxu0 0.0
    %893 = vmatmul.mubr.f32.gmra.mrb[0].mxu0 %v225
    %v894 = vpop.f32.mrb[0].mxu0
    %v895 = vadd.f32 %v208, %v894
    %v896 = vpop.f32.mrb[0].mxu0
    %v897 = vadd.f32 %v208, %v896
    %898 = vmatprep.mubr.f32.mxu0 0.0
    %899 = vmatmul.mubr.f32.gmra.mrb[0].mxu0 %v228
    %v900 = vpop.f32.mrb[0].mxu0
    %v901 = vadd.f32 %v213, %v900
    %v902 = vpop.f32.mrb[0].mxu0
    %v903 = vadd.f32 %v213, %v902
    %904 = vmatprep.mubr.f32.mxu0 0.0
    %905 = vmatmul.mubr.f32.gmra.mrb[0].mxu0 %v231
    %v906 = vpop.f32.mrb[0].mxu0
    %v907 = vadd.f32 %v218, %v906
    %v908 = vpop.f32.mrb[0].mxu0
    %v909 = vadd.f32 %v218, %v908
    %910 = vdwg.mxu0
    %v911 = vtanh.pop %v889
    %v912 = vtanh.pop %v891
    %v913 = vtanh.pop %v895
    %v914 = vtanh.pop %v897
    %v915 = vtanh.pop %v901
    %v916 = vtanh.pop %v903
    %v917 = vtanh.pop %v907
    %v918 = vtanh.pop %v909
    %v919 = vmul.f32 %v911, %v333
    %v920 = vmul.f32 %v912, %v333
    %v921 = vmul.f32 %v913, %v338
    %v922 = vmul.f32 %v914, %v338
    %v923 = vmul.f32 %v915, %v343
    %v924 = vmul.f32 %v916, %v343
    %v925 = vmul.f32 %v917, %v348
    %v926 = vmul.f32 %v918, %v348
    %v927 = vadd.f32 %v919, %v921
    %v928 = vadd.f32 %v927, %v923
    %v929 = vadd.f32 %v928, %v925
    %v930 = vrot.slane %v929, 4
    %v931 = vadd.f32 %v929, %v930
    %v932 = vrot.slane %v931, 2
    %v933 = vadd.f32 %v931, %v932
    %v934 = vrot.slane %v933, 1
    %v935 = vadd.f32 %v933, %v934
    %v936 = vadd.f32 %v920, %v922
    %v937 = vadd.f32 %v936, %v924
    %v938 = vadd.f32 %v937, %v926
    %v939 = vrot.slane %v938, 4
    %v940 = vadd.f32 %v938, %v939
    %v941 = vrot.slane %v940, 2
    %v942 = vadd.f32 %v940, %v941
    %v943 = vrot.slane %v942, 1
    %v944 = vadd.f32 %v942, %v943
    %v945 = vadd.f32 %v935, %v384
    %v946 = vadd.f32 %v944, %v384
    %v947 = vmul.f32 %v68, %v945
    %v948 = vmul.f32 %v69, %v946
    %v949 = vmul.f32 %v947, 0.5
    %v950 = vmul.f32 %v948, 0.5
    %v951 = vtanh.pop %v949
    %v952 = vtanh.pop %v950
    %v953 = vadd.f32 %v951, 1.0
    %v954 = vadd.f32 %v952, 1.0
    %v955 = vmul.f32 %v953, 0.5
    %v956 = vmul.f32 %v954, 0.5
    %v959 = vrot.slane %v955, 2
    %v960 = vrot.slane %v956, 2
    %v963 = vmul.f32 %v699, %v959
    %v964 = vmul.f32 %v700, %v960
    %965 = vmatprep.subr.mxu0 %v815
    %966 = vmatpush1.msra.mxu0 %v814
    %967 = vmatprep.subr.mxu0 %v817
    %968 = vmatpush1.msra.mxu0 %v816
    %969 = vmatprep.subr.mxu0 %v819
    %970 = vmatpush1.msra.mxu0 %v818
    %971 = vmatprep.subr.mxu0 %v821
    %972 = vmatpush1.msra.mxu0 %v820
    %973 = vmatprep.subr.mxu0 0.0
    %974 = vmatpush1.msra.mxu0 0.0
    %975 = vmatprep.subr.mxu0 0.0
    %976 = vmatpush1.msra.mxu0 0.0
    %977 = vmatprep.subr.mxu0 0.0
    %978 = vmatpush1.msra.mxu0 0.0
    %979 = vmatprep.subr.mxu0 0.0
    %980 = vmatpush1.msra.mxu0 0.0
    %981 = vmatprep.subr.mxu0 0.0
    %982 = vmatpush1.msra.mxu0 0.0
    %983 = vmatprep.subr.mxu0 0.0
    %984 = vmatpush1.msra.mxu0 0.0
    %985 = vmatprep.subr.mxu0 0.0
    %986 = vmatpush1.msra.mxu0 0.0
    %987 = vmatprep.subr.mxu0 0.0
    %988 = vmatpush1.msra.mxu0 0.0
    %989 = vmatprep.subr.mxu0 0.0
    %990 = vmatpush1.msra.mxu0 0.0
    %991 = vmatprep.subr.mxu0 0.0
    %992 = vmatpush1.msra.mxu0 0.0
    %993 = vmatprep.subr.mxu0 0.0
    %994 = vmatpush1.msra.mxu0 0.0
    %995 = vmatprep.subr.mxu0 0.0
    %996 = vmatpush1.msra.mxu0 0.0
    %997 = vmatprep.subr.mxu0 0.0
    %998 = vmatpush1.msra.mxu0 0.0
    %999 = vmatprep.subr.mxu0 0.0
    %1000 = vmatpush1.msra.mxu0 0.0
    %1001 = vmatprep.subr.mxu0 0.0
    %1002 = vmatpush1.msra.mxu0 0.0
    %1003 = vmatprep.subr.mxu0 0.0
    %1004 = vmatpush1.msra.mxu0 0.0
    %1005 = vmatprep.subr.mxu0 0.0
    %1006 = vmatpush1.msra.mxu0 0.0
    %1007 = vmatprep.subr.mxu0 0.0
    %1008 = vmatpush1.msra.mxu0 0.0
    %1009 = vmatprep.subr.mxu0 0.0
    %1010 = vmatpush1.msra.mxu0 0.0
    %1011 = vmatprep.subr.mxu0 0.0
    %1012 = vmatpush1.msra.mxu0 0.0
    %1013 = vmatprep.subr.mxu0 0.0
    %1014 = vmatpush1.msra.mxu0 0.0
    %1015 = vmatprep.subr.mxu0 0.0
    %1016 = vmatpush1.msra.mxu0 0.0
    %1017 = vmatprep.subr.mxu0 0.0
    %1018 = vmatpush1.msra.mxu0 0.0
    %1019 = vmatprep.subr.mxu0 0.0
    %1020 = vmatpush1.msra.mxu0 0.0
    %1021 = vmatprep.subr.mxu0 0.0
    %1022 = vmatpush1.msra.mxu0 0.0
    %1023 = vmatprep.subr.mxu0 0.0
    %1024 = vmatpush1.msra.mxu0 0.0
    %1025 = vmatprep.subr.mxu0 0.0
    %1026 = vmatpush1.msra.mxu0 0.0
    %1027 = vmatprep.subr.mxu0 0.0
    %1028 = vmatpush1.msra.mxu0 0.0
    %1029 = vmatprep.mubr.f32.mxu0 0.0
    %1030 = vmatmul.mubr.f32.gmra.mrb[0].mxu0 %v92
    %v1031 = vpop.f32.mrb[0].mxu0
    %v1032 = vadd.f32 %v400, %v1031
    %v1033 = vpop.f32.mrb[0].mxu0
    %v1034 = vadd.f32 %v400, %v1033
    %1035 = vmatprep.mubr.f32.mxu0 0.0
    %1036 = vmatmul.mubr.f32.gmra.mrb[0].mxu0 %v95
    %v1037 = vpop.f32.mrb[0].mxu0
    %v1038 = vadd.f32 %v405, %v1037
    %v1039 = vpop.f32.mrb[0].mxu0
    %v1040 = vadd.f32 %v405, %v1039
    %1041 = vmatprep.mubr.f32.mxu0 0.0
    %1042 = vmatmul.mubr.f32.gmra.mrb[0].mxu0 %v98
    %v1043 = vpop.f32.mrb[0].mxu0
    %v1044 = vadd.f32 %v410, %v1043
    %v1045 = vpop.f32.mrb[0].mxu0
    %v1046 = vadd.f32 %v410, %v1045
    %1047 = vmatprep.mubr.f32.mxu0 0.0
    %1048 = vmatmul.mubr.f32.gmra.mrb[0].mxu0 %v101
    %v1049 = vpop.f32.mrb[0].mxu0
    %v1050 = vadd.f32 %v415, %v1049
    %v1051 = vpop.f32.mrb[0].mxu0
    %v1052 = vadd.f32 %v415, %v1051
    %1053 = vdwg.mxu0
    %v1054 = vlaneseq
    %v1055 = vshrl.u32 %v1054, 7
    %v1056 = vsub.s32 2, %v1055
    %v1057 = vrot.slane %v64, %v1056
    %v1058 = vlaneseq
    %v1059 = vshrl.u32 %v1058, 7
    %v1060 = vsub.s32 2, %v1059
    %v1061 = vrot.slane %v65, %v1060
    %v1062 = vmul.f32 %v1057, %v517
    %v1063 = vmul.f32 %v1061, %v517
    %v1064 = vmul.f32 %v1057, %v522
    %v1065 = vmul.f32 %v1061, %v522
    %v1066 = vmul.f32 %v1057, %v527
    %v1067 = vmul.f32 %v1061, %v527
    %v1068 = vmul.f32 %v1057, %v532
    %v1069 = vmul.f32 %v1061, %v532
    %v1070 = vadd.f32 %v1032, %v1062
    %v1071 = vadd.f32 %v1034, %v1063
    %v1072 = vadd.f32 %v1038, %v1064
    %v1073 = vadd.f32 %v1040, %v1065
    %v1074 = vadd.f32 %v1044, %v1066
    %v1075 = vadd.f32 %v1046, %v1067
    %v1076 = vadd.f32 %v1050, %v1068
    %v1077 = vadd.f32 %v1052, %v1069
    %v1078 = vtanh.pop %v1070
    %v1079 = vtanh.pop %v1071
    %v1080 = vtanh.pop %v1072
    %v1081 = vtanh.pop %v1073
    %v1082 = vtanh.pop %v1074
    %v1083 = vtanh.pop %v1075
    %v1084 = vtanh.pop %v1076
    %v1085 = vtanh.pop %v1077
    %1086 = vmatprep.subr.mxu0 %v1079
    %1087 = vmatpush1.msra.mxu0 %v1078
    %1088 = vmatprep.subr.mxu0 %v1081
    %1089 = vmatpush1.msra.mxu0 %v1080
    %1090 = vmatprep.subr.mxu0 %v1083
    %1091 = vmatpush1.msra.mxu0 %v1082
    %1092 = vmatprep.subr.mxu0 %v1085
    %1093 = vmatpush1.msra.mxu0 %v1084
    %1094 = vmatprep.subr.mxu0 %v912
    %1095 = vmatpush1.msra.mxu0 %v911
    %1096 = vmatprep.subr.mxu0 %v914
    %1097 = vmatpush1.msra.mxu0 %v913
    %1098 = vmatprep.subr.mxu0 %v916
    %1099 = vmatpush1.msra.mxu0 %v915
    %1100 = vmatprep.subr.mxu0 %v918
    %1101 = vmatpush1.msra.mxu0 %v917
    %1102 = vmatprep.subr.mxu0 0.0
    %1103 = vmatpush1.msra.mxu0 0.0
    %1104 = vmatprep.subr.mxu0 0.0
    %1105 = vmatpush1.msra.mxu0 0.0
    %1106 = vmatprep.subr.mxu0 0.0
    %1107 = vmatpush1.msra.mxu0 0.0
    %1108 = vmatprep.subr.mxu0 0.0
    %1109 = vmatpush1.msra.mxu0 0.0
    %1110 = vmatprep.subr.mxu0 0.0
    %1111 = vmatpush1.msra.mxu0 0.0
    %1112 = vmatprep.subr.mxu0 0.0
    %1113 = vmatpush1.msra.mxu0 0.0
    %1114 = vmatprep.subr.mxu0 0.0
    %1115 = vmatpush1.msra.mxu0 0.0
    %1116 = vmatprep.subr.mxu0 0.0
    %1117 = vmatpush1.msra.mxu0 0.0
    %1118 = vmatprep.subr.mxu0 0.0
    %1119 = vmatpush1.msra.mxu0 0.0
    %1120 = vmatprep.subr.mxu0 0.0
    %1121 = vmatpush1.msra.mxu0 0.0
    %1122 = vmatprep.subr.mxu0 0.0
    %1123 = vmatpush1.msra.mxu0 0.0
    %1124 = vmatprep.subr.mxu0 0.0
    %1125 = vmatpush1.msra.mxu0 0.0
    %1126 = vmatprep.subr.mxu0 0.0
    %1127 = vmatpush1.msra.mxu0 0.0
    %1128 = vmatprep.subr.mxu0 0.0
    %1129 = vmatpush1.msra.mxu0 0.0
    %1130 = vmatprep.subr.mxu0 0.0
    %1131 = vmatpush1.msra.mxu0 0.0
    %1132 = vmatprep.subr.mxu0 0.0
    %1133 = vmatpush1.msra.mxu0 0.0
    %1134 = vmatprep.subr.mxu0 0.0
    %1135 = vmatpush1.msra.mxu0 0.0
    %1136 = vmatprep.subr.mxu0 0.0
    %1137 = vmatpush1.msra.mxu0 0.0
    %1138 = vmatprep.subr.mxu0 0.0
    %1139 = vmatpush1.msra.mxu0 0.0
    %1140 = vmatprep.subr.mxu0 0.0
    %1141 = vmatpush1.msra.mxu0 0.0
    %1142 = vmatprep.subr.mxu0 0.0
    %1143 = vmatpush1.msra.mxu0 0.0
    %1144 = vmatprep.subr.mxu0 0.0
    %1145 = vmatpush1.msra.mxu0 0.0
    %1146 = vmatprep.subr.mxu0 0.0
    %1147 = vmatpush1.msra.mxu0 0.0
    %1148 = vmatprep.subr.mxu0 0.0
    %1149 = vmatpush1.msra.mxu0 0.0
    %1150 = vmatprep.mubr.f32.mxu0 0.0
    %1151 = vmatmul.mubr.f32.gmra.mrb[0].mxu0 %v222
    %v1152 = vpop.f32.mrb[0].mxu0
    %v1153 = vadd.f32 %v203, %v1152
    %v1154 = vpop.f32.mrb[0].mxu0
    %v1155 = vadd.f32 %v203, %v1154
    %1156 = vmatprep.mubr.f32.mxu0 0.0
    %1157 = vmatmul.mubr.f32.gmra.mrb[0].mxu0 %v225
    %v1158 = vpop.f32.mrb[0].mxu0
    %v1159 = vadd.f32 %v208, %v1158
    %v1160 = vpop.f32.mrb[0].mxu0
    %v1161 = vadd.f32 %v208, %v1160
    %1162 = vmatprep.mubr.f32.mxu0 0.0
    %1163 = vmatmul.mubr.f32.gmra.mrb[0].mxu0 %v228
    %v1164 = vpop.f32.mrb[0].mxu0
    %v1165 = vadd.f32 %v213, %v1164
    %v1166 = vpop.f32.mrb[0].mxu0
    %v1167 = vadd.f32 %v213, %v1166
    %1168 = vmatprep.mubr.f32.mxu0 0.0
    %1169 = vmatmul.mubr.f32.gmra.mrb[0].mxu0 %v231
    %v1170 = vpop.f32.mrb[0].mxu0
    %v1171 = vadd.f32 %v218, %v1170
    %v1172 = vpop.f32.mrb[0].mxu0
    %v1173 = vadd.f32 %v218, %v1172
    %1174 = vdwg.mxu0
    %v1175 = vtanh.pop %v1153
    %v1176 = vtanh.pop %v1155
    %v1177 = vtanh.pop %v1159
    %v1178 = vtanh.pop %v1161
    %v1179 = vtanh.pop %v1165
    %v1180 = vtanh.pop %v1167
    %v1181 = vtanh.pop %v1171
    %v1182 = vtanh.pop %v1173
    %v1183 = vmul.f32 %v1175, %v333
    %v1184 = vmul.f32 %v1176, %v333
    %v1185 = vmul.f32 %v1177, %v338
    %v1186 = vmul.f32 %v1178, %v338
    %v1187 = vmul.f32 %v1179, %v343
    %v1188 = vmul.f32 %v1180, %v343
    %v1189 = vmul.f32 %v1181, %v348
    %v1190 = vmul.f32 %v1182, %v348
    %v1191 = vadd.f32 %v1183, %v1185
    %v1192 = vadd.f32 %v1191, %v1187
    %v1193 = vadd.f32 %v1192, %v1189
    %v1194 = vrot.slane %v1193, 4
    %v1195 = vadd.f32 %v1193, %v1194
    %v1196 = vrot.slane %v1195, 2
    %v1197 = vadd.f32 %v1195, %v1196
    %v1198 = vrot.slane %v1197, 1
    %v1199 = vadd.f32 %v1197, %v1198
    %v1200 = vadd.f32 %v1184, %v1186
    %v1201 = vadd.f32 %v1200, %v1188
    %v1202 = vadd.f32 %v1201, %v1190
    %v1203 = vrot.slane %v1202, 4
    %v1204 = vadd.f32 %v1202, %v1203
    %v1205 = vrot.slane %v1204, 2
    %v1206 = vadd.f32 %v1204, %v1205
    %v1207 = vrot.slane %v1206, 1
    %v1208 = vadd.f32 %v1206, %v1207
    %v1209 = vadd.f32 %v1199, %v384
    %v1210 = vadd.f32 %v1208, %v384
    %v1211 = vmul.f32 %v68, %v1209
    %v1212 = vmul.f32 %v69, %v1210
    %v1213 = vmul.f32 %v1211, 0.5
    %v1214 = vmul.f32 %v1212, 0.5
    %v1215 = vtanh.pop %v1213
    %v1216 = vtanh.pop %v1214
    %v1217 = vadd.f32 %v1215, 1.0
    %v1218 = vadd.f32 %v1216, 1.0
    %v1219 = vmul.f32 %v1217, 0.5
    %v1220 = vmul.f32 %v1218, 0.5
    %v1223 = vrot.slane %v1219, 3
    %v1224 = vrot.slane %v1220, 3
    %v1227 = vmul.f32 %v963, %v1223
    %v1228 = vmul.f32 %v964, %v1224
    %1229 = vmatprep.subr.mxu0 %v1079
    %1230 = vmatpush1.msra.mxu0 %v1078
    %1231 = vmatprep.subr.mxu0 %v1081
    %1232 = vmatpush1.msra.mxu0 %v1080
    %1233 = vmatprep.subr.mxu0 %v1083
    %1234 = vmatpush1.msra.mxu0 %v1082
    %1235 = vmatprep.subr.mxu0 %v1085
    %1236 = vmatpush1.msra.mxu0 %v1084
    %1237 = vmatprep.subr.mxu0 0.0
    %1238 = vmatpush1.msra.mxu0 0.0
    %1239 = vmatprep.subr.mxu0 0.0
    %1240 = vmatpush1.msra.mxu0 0.0
    %1241 = vmatprep.subr.mxu0 0.0
    %1242 = vmatpush1.msra.mxu0 0.0
    %1243 = vmatprep.subr.mxu0 0.0
    %1244 = vmatpush1.msra.mxu0 0.0
    %1245 = vmatprep.subr.mxu0 0.0
    %1246 = vmatpush1.msra.mxu0 0.0
    %1247 = vmatprep.subr.mxu0 0.0
    %1248 = vmatpush1.msra.mxu0 0.0
    %1249 = vmatprep.subr.mxu0 0.0
    %1250 = vmatpush1.msra.mxu0 0.0
    %1251 = vmatprep.subr.mxu0 0.0
    %1252 = vmatpush1.msra.mxu0 0.0
    %1253 = vmatprep.subr.mxu0 0.0
    %1254 = vmatpush1.msra.mxu0 0.0
    %1255 = vmatprep.subr.mxu0 0.0
    %1256 = vmatpush1.msra.mxu0 0.0
    %1257 = vmatprep.subr.mxu0 0.0
    %1258 = vmatpush1.msra.mxu0 0.0
    %1259 = vmatprep.subr.mxu0 0.0
    %1260 = vmatpush1.msra.mxu0 0.0
    %1261 = vmatprep.subr.mxu0 0.0
    %1262 = vmatpush1.msra.mxu0 0.0
    %1263 = vmatprep.subr.mxu0 0.0
    %1264 = vmatpush1.msra.mxu0 0.0
    %1265 = vmatprep.subr.mxu0 0.0
    %1266 = vmatpush1.msra.mxu0 0.0
    %1267 = vmatprep.subr.mxu0 0.0
    %1268 = vmatpush1.msra.mxu0 0.0
    %1269 = vmatprep.subr.mxu0 0.0
    %1270 = vmatpush1.msra.mxu0 0.0
    %1271 = vmatprep.subr.mxu0 0.0
    %1272 = vmatpush1.msra.mxu0 0.0
    %1273 = vmatprep.subr.mxu0 0.0
    %1274 = vmatpush1.msra.mxu0 0.0
    %1275 = vmatprep.subr.mxu0 0.0
    %1276 = vmatpush1.msra.mxu0 0.0
    %1277 = vmatprep.subr.mxu0 0.0
    %1278 = vmatpush1.msra.mxu0 0.0
    %1279 = vmatprep.subr.mxu0 0.0
    %1280 = vmatpush1.msra.mxu0 0.0
    %1281 = vmatprep.subr.mxu0 0.0
    %1282 = vmatpush1.msra.mxu0 0.0
    %1283 = vmatprep.subr.mxu0 0.0
    %1284 = vmatpush1.msra.mxu0 0.0
    %1285 = vmatprep.subr.mxu0 0.0
    %1286 = vmatpush1.msra.mxu0 0.0
    %1287 = vmatprep.subr.mxu0 0.0
    %1288 = vmatpush1.msra.mxu0 0.0
    %1289 = vmatprep.subr.mxu0 0.0
    %1290 = vmatpush1.msra.mxu0 0.0
    %1291 = vmatprep.subr.mxu0 0.0
    %1292 = vmatpush1.msra.mxu0 0.0
    %1293 = vmatprep.mubr.f32.mxu0 0.0
    %1294 = vmatmul.mubr.f32.gmra.mrb[0].mxu0 %v92
    %v1295 = vpop.f32.mrb[0].mxu0
    %v1296 = vadd.f32 %v400, %v1295
    %v1297 = vpop.f32.mrb[0].mxu0
    %v1298 = vadd.f32 %v400, %v1297
    %1299 = vmatprep.mubr.f32.mxu0 0.0
    %1300 = vmatmul.mubr.f32.gmra.mrb[0].mxu0 %v95
    %v1301 = vpop.f32.mrb[0].mxu0
    %v1302 = vadd.f32 %v405, %v1301
    %v1303 = vpop.f32.mrb[0].mxu0
    %v1304 = vadd.f32 %v405, %v1303
    %1305 = vmatprep.mubr.f32.mxu0 0.0
    %1306 = vmatmul.mubr.f32.gmra.mrb[0].mxu0 %v98
    %v1307 = vpop.f32.mrb[0].mxu0
    %v1308 = vadd.f32 %v410, %v1307
    %v1309 = vpop.f32.mrb[0].mxu0
    %v1310 = vadd.f32 %v410, %v1309
    %1311 = vmatprep.mubr.f32.mxu0 0.0
    %1312 = vmatmul.mubr.f32.gmra.mrb[0].mxu0 %v101
    %v1313 = vpop.f32.mrb[0].mxu0
    %v1314 = vadd.f32 %v415, %v1313
    %v1315 = vpop.f32.mrb[0].mxu0
    %v1316 = vadd.f32 %v415, %v1315
    %1317 = vdwg.mxu0
    %v1318 = vlaneseq
    %v1319 = vshrl.u32 %v1318, 7
    %v1320 = vsub.s32 3, %v1319
    %v1321 = vrot.slane %v64, %v1320
    %v1322 = vlaneseq
    %v1323 = vshrl.u32 %v1322, 7
    %v1324 = vsub.s32 3, %v1323
    %v1325 = vrot.slane %v65, %v1324
    %v1326 = vmul.f32 %v1321, %v517
    %v1327 = vmul.f32 %v1325, %v517
    %v1328 = vmul.f32 %v1321, %v522
    %v1329 = vmul.f32 %v1325, %v522
    %v1330 = vmul.f32 %v1321, %v527
    %v1331 = vmul.f32 %v1325, %v527
    %v1332 = vmul.f32 %v1321, %v532
    %v1333 = vmul.f32 %v1325, %v532
    %v1334 = vadd.f32 %v1296, %v1326
    %v1335 = vadd.f32 %v1298, %v1327
    %v1336 = vadd.f32 %v1302, %v1328
    %v1337 = vadd.f32 %v1304, %v1329
    %v1338 = vadd.f32 %v1308, %v1330
    %v1339 = vadd.f32 %v1310, %v1331
    %v1340 = vadd.f32 %v1314, %v1332
    %v1341 = vadd.f32 %v1316, %v1333
    %v1342 = vtanh.pop %v1334
    %v1343 = vtanh.pop %v1335
    %v1344 = vtanh.pop %v1336
    %v1345 = vtanh.pop %v1337
    %v1346 = vtanh.pop %v1338
    %v1347 = vtanh.pop %v1339
    %v1348 = vtanh.pop %v1340
    %v1349 = vtanh.pop %v1341
    %1350 = vmatprep.subr.mxu0 %v1343
    %1351 = vmatpush1.msra.mxu0 %v1342
    %1352 = vmatprep.subr.mxu0 %v1345
    %1353 = vmatpush1.msra.mxu0 %v1344
    %1354 = vmatprep.subr.mxu0 %v1347
    %1355 = vmatpush1.msra.mxu0 %v1346
    %1356 = vmatprep.subr.mxu0 %v1349
    %1357 = vmatpush1.msra.mxu0 %v1348
    %1358 = vmatprep.subr.mxu0 %v1176
    %1359 = vmatpush1.msra.mxu0 %v1175
    %1360 = vmatprep.subr.mxu0 %v1178
    %1361 = vmatpush1.msra.mxu0 %v1177
    %1362 = vmatprep.subr.mxu0 %v1180
    %1363 = vmatpush1.msra.mxu0 %v1179
    %1364 = vmatprep.subr.mxu0 %v1182
    %1365 = vmatpush1.msra.mxu0 %v1181
    %1366 = vmatprep.subr.mxu0 0.0
    %1367 = vmatpush1.msra.mxu0 0.0
    %1368 = vmatprep.subr.mxu0 0.0
    %1369 = vmatpush1.msra.mxu0 0.0
    %1370 = vmatprep.subr.mxu0 0.0
    %1371 = vmatpush1.msra.mxu0 0.0
    %1372 = vmatprep.subr.mxu0 0.0
    %1373 = vmatpush1.msra.mxu0 0.0
    %1374 = vmatprep.subr.mxu0 0.0
    %1375 = vmatpush1.msra.mxu0 0.0
    %1376 = vmatprep.subr.mxu0 0.0
    %1377 = vmatpush1.msra.mxu0 0.0
    %1378 = vmatprep.subr.mxu0 0.0
    %1379 = vmatpush1.msra.mxu0 0.0
    %1380 = vmatprep.subr.mxu0 0.0
    %1381 = vmatpush1.msra.mxu0 0.0
    %1382 = vmatprep.subr.mxu0 0.0
    %1383 = vmatpush1.msra.mxu0 0.0
    %1384 = vmatprep.subr.mxu0 0.0
    %1385 = vmatpush1.msra.mxu0 0.0
    %1386 = vmatprep.subr.mxu0 0.0
    %1387 = vmatpush1.msra.mxu0 0.0
    %1388 = vmatprep.subr.mxu0 0.0
    %1389 = vmatpush1.msra.mxu0 0.0
    %1390 = vmatprep.subr.mxu0 0.0
    %1391 = vmatpush1.msra.mxu0 0.0
    %1392 = vmatprep.subr.mxu0 0.0
    %1393 = vmatpush1.msra.mxu0 0.0
    %1394 = vmatprep.subr.mxu0 0.0
    %1395 = vmatpush1.msra.mxu0 0.0
    %1396 = vmatprep.subr.mxu0 0.0
    %1397 = vmatpush1.msra.mxu0 0.0
    %1398 = vmatprep.subr.mxu0 0.0
    %1399 = vmatpush1.msra.mxu0 0.0
    %1400 = vmatprep.subr.mxu0 0.0
    %1401 = vmatpush1.msra.mxu0 0.0
    %1402 = vmatprep.subr.mxu0 0.0
    %1403 = vmatpush1.msra.mxu0 0.0
    %1404 = vmatprep.subr.mxu0 0.0
    %1405 = vmatpush1.msra.mxu0 0.0
    %1406 = vmatprep.subr.mxu0 0.0
    %1407 = vmatpush1.msra.mxu0 0.0
    %1408 = vmatprep.subr.mxu0 0.0
    %1409 = vmatpush1.msra.mxu0 0.0
    %1410 = vmatprep.subr.mxu0 0.0
    %1411 = vmatpush1.msra.mxu0 0.0
    %1412 = vmatprep.subr.mxu0 0.0
    %1413 = vmatpush1.msra.mxu0 0.0
    %1414 = vmatprep.mubr.f32.mxu0 0.0
    %1415 = vmatmul.mubr.f32.gmra.mrb[0].mxu0 %v222
    %v1416 = vpop.f32.mrb[0].mxu0
    %v1417 = vadd.f32 %v203, %v1416
    %v1418 = vpop.f32.mrb[0].mxu0
    %v1419 = vadd.f32 %v203, %v1418
    %1420 = vmatprep.mubr.f32.mxu0 0.0
    %1421 = vmatmul.mubr.f32.gmra.mrb[0].mxu0 %v225
    %v1422 = vpop.f32.mrb[0].mxu0
    %v1423 = vadd.f32 %v208, %v1422
    %v1424 = vpop.f32.mrb[0].mxu0
    %v1425 = vadd.f32 %v208, %v1424
    %1426 = vmatprep.mubr.f32.mxu0 0.0
    %1427 = vmatmul.mubr.f32.gmra.mrb[0].mxu0 %v228
    %v1428 = vpop.f32.mrb[0].mxu0
    %v1429 = vadd.f32 %v213, %v1428
    %v1430 = vpop.f32.mrb[0].mxu0
    %v1431 = vadd.f32 %v213, %v1430
    %1432 = vmatprep.mubr.f32.mxu0 0.0
    %1433 = vmatmul.mubr.f32.gmra.mrb[0].mxu0 %v231
    %v1434 = vpop.f32.mrb[0].mxu0
    %v1435 = vadd.f32 %v218, %v1434
    %v1436 = vpop.f32.mrb[0].mxu0
    %v1437 = vadd.f32 %v218, %v1436
    %1438 = vdwg.mxu0
    %v1439 = vtanh.pop %v1417
    %v1440 = vtanh.pop %v1419
    %v1441 = vtanh.pop %v1423
    %v1442 = vtanh.pop %v1425
    %v1443 = vtanh.pop %v1429
    %v1444 = vtanh.pop %v1431
    %v1445 = vtanh.pop %v1435
    %v1446 = vtanh.pop %v1437
    %v1447 = vmul.f32 %v1439, %v333
    %v1448 = vmul.f32 %v1440, %v333
    %v1449 = vmul.f32 %v1441, %v338
    %v1450 = vmul.f32 %v1442, %v338
    %v1451 = vmul.f32 %v1443, %v343
    %v1452 = vmul.f32 %v1444, %v343
    %v1453 = vmul.f32 %v1445, %v348
    %v1454 = vmul.f32 %v1446, %v348
    %v1455 = vadd.f32 %v1447, %v1449
    %v1456 = vadd.f32 %v1455, %v1451
    %v1457 = vadd.f32 %v1456, %v1453
    %v1458 = vrot.slane %v1457, 4
    %v1459 = vadd.f32 %v1457, %v1458
    %v1460 = vrot.slane %v1459, 2
    %v1461 = vadd.f32 %v1459, %v1460
    %v1462 = vrot.slane %v1461, 1
    %v1463 = vadd.f32 %v1461, %v1462
    %v1464 = vadd.f32 %v1448, %v1450
    %v1465 = vadd.f32 %v1464, %v1452
    %v1466 = vadd.f32 %v1465, %v1454
    %v1467 = vrot.slane %v1466, 4
    %v1468 = vadd.f32 %v1466, %v1467
    %v1469 = vrot.slane %v1468, 2
    %v1470 = vadd.f32 %v1468, %v1469
    %v1471 = vrot.slane %v1470, 1
    %v1472 = vadd.f32 %v1470, %v1471
    %v1473 = vadd.f32 %v1463, %v384
    %v1474 = vadd.f32 %v1472, %v384
    %v1475 = vmul.f32 %v68, %v1473
    %v1476 = vmul.f32 %v69, %v1474
    %v1477 = vmul.f32 %v1475, 0.5
    %v1478 = vmul.f32 %v1476, 0.5
    %v1479 = vtanh.pop %v1477
    %v1480 = vtanh.pop %v1478
    %v1481 = vadd.f32 %v1479, 1.0
    %v1482 = vadd.f32 %v1480, 1.0
    %v1483 = vmul.f32 %v1481, 0.5
    %v1484 = vmul.f32 %v1482, 0.5
    %v1487 = vrot.slane %v1483, 4
    %v1488 = vrot.slane %v1484, 4
    %v1491 = vmul.f32 %v1227, %v1487
    %v1492 = vmul.f32 %v1228, %v1488
    %1493 = vmatprep.subr.mxu0 %v1343
    %1494 = vmatpush1.msra.mxu0 %v1342
    %1495 = vmatprep.subr.mxu0 %v1345
    %1496 = vmatpush1.msra.mxu0 %v1344
    %1497 = vmatprep.subr.mxu0 %v1347
    %1498 = vmatpush1.msra.mxu0 %v1346
    %1499 = vmatprep.subr.mxu0 %v1349
    %1500 = vmatpush1.msra.mxu0 %v1348
    %1501 = vmatprep.subr.mxu0 0.0
    %1502 = vmatpush1.msra.mxu0 0.0
    %1503 = vmatprep.subr.mxu0 0.0
    %1504 = vmatpush1.msra.mxu0 0.0
    %1505 = vmatprep.subr.mxu0 0.0
    %1506 = vmatpush1.msra.mxu0 0.0
    %1507 = vmatprep.subr.mxu0 0.0
    %1508 = vmatpush1.msra.mxu0 0.0
    %1509 = vmatprep.subr.mxu0 0.0
    %1510 = vmatpush1.msra.mxu0 0.0
    %1511 = vmatprep.subr.mxu0 0.0
    %1512 = vmatpush1.msra.mxu0 0.0
    %1513 = vmatprep.subr.mxu0 0.0
    %1514 = vmatpush1.msra.mxu0 0.0
    %1515 = vmatprep.subr.mxu0 0.0
    %1516 = vmatpush1.msra.mxu0 0.0
    %1517 = vmatprep.subr.mxu0 0.0
    %1518 = vmatpush1.msra.mxu0 0.0
    %1519 = vmatprep.subr.mxu0 0.0
    %1520 = vmatpush1.msra.mxu0 0.0
    %1521 = vmatprep.subr.mxu0 0.0
    %1522 = vmatpush1.msra.mxu0 0.0
    %1523 = vmatprep.subr.mxu0 0.0
    %1524 = vmatpush1.msra.mxu0 0.0
    %1525 = vmatprep.subr.mxu0 0.0
    %1526 = vmatpush1.msra.mxu0 0.0
    %1527 = vmatprep.subr.mxu0 0.0
    %1528 = vmatpush1.msra.mxu0 0.0
    %1529 = vmatprep.subr.mxu0 0.0
    %1530 = vmatpush1.msra.mxu0 0.0
    %1531 = vmatprep.subr.mxu0 0.0
    %1532 = vmatpush1.msra.mxu0 0.0
    %1533 = vmatprep.subr.mxu0 0.0
    %1534 = vmatpush1.msra.mxu0 0.0
    %1535 = vmatprep.subr.mxu0 0.0
    %1536 = vmatpush1.msra.mxu0 0.0
    %1537 = vmatprep.subr.mxu0 0.0
    %1538 = vmatpush1.msra.mxu0 0.0
    %1539 = vmatprep.subr.mxu0 0.0
    %1540 = vmatpush1.msra.mxu0 0.0
    %1541 = vmatprep.subr.mxu0 0.0
    %1542 = vmatpush1.msra.mxu0 0.0
    %1543 = vmatprep.subr.mxu0 0.0
    %1544 = vmatpush1.msra.mxu0 0.0
    %1545 = vmatprep.subr.mxu0 0.0
    %1546 = vmatpush1.msra.mxu0 0.0
    %1547 = vmatprep.subr.mxu0 0.0
    %1548 = vmatpush1.msra.mxu0 0.0
    %1549 = vmatprep.subr.mxu0 0.0
    %1550 = vmatpush1.msra.mxu0 0.0
    %1551 = vmatprep.subr.mxu0 0.0
    %1552 = vmatpush1.msra.mxu0 0.0
    %1553 = vmatprep.subr.mxu0 0.0
    %1554 = vmatpush1.msra.mxu0 0.0
    %1555 = vmatprep.subr.mxu0 0.0
    %1556 = vmatpush1.msra.mxu0 0.0
    %1557 = vmatprep.mubr.f32.mxu0 0.0
    %1558 = vmatmul.mubr.f32.gmra.mrb[0].mxu0 %v92
    %v1559 = vpop.f32.mrb[0].mxu0
    %v1560 = vadd.f32 %v400, %v1559
    %v1561 = vpop.f32.mrb[0].mxu0
    %v1562 = vadd.f32 %v400, %v1561
    %1563 = vmatprep.mubr.f32.mxu0 0.0
    %1564 = vmatmul.mubr.f32.gmra.mrb[0].mxu0 %v95
    %v1565 = vpop.f32.mrb[0].mxu0
    %v1566 = vadd.f32 %v405, %v1565
    %v1567 = vpop.f32.mrb[0].mxu0
    %v1568 = vadd.f32 %v405, %v1567
    %1569 = vmatprep.mubr.f32.mxu0 0.0
    %1570 = vmatmul.mubr.f32.gmra.mrb[0].mxu0 %v98
    %v1571 = vpop.f32.mrb[0].mxu0
    %v1572 = vadd.f32 %v410, %v1571
    %v1573 = vpop.f32.mrb[0].mxu0
    %v1574 = vadd.f32 %v410, %v1573
    %1575 = vmatprep.mubr.f32.mxu0 0.0
    %1576 = vmatmul.mubr.f32.gmra.mrb[0].mxu0 %v101
    %v1577 = vpop.f32.mrb[0].mxu0
    %v1578 = vadd.f32 %v415, %v1577
    %v1579 = vpop.f32.mrb[0].mxu0
    %v1580 = vadd.f32 %v415, %v1579
    %1581 = vdwg.mxu0
    %v1582 = vlaneseq
    %v1583 = vshrl.u32 %v1582, 7
    %v1584 = vsub.s32 4, %v1583
    %v1585 = vrot.slane %v64, %v1584
    %v1586 = vlaneseq
    %v1587 = vshrl.u32 %v1586, 7
    %v1588 = vsub.s32 4, %v1587
    %v1589 = vrot.slane %v65, %v1588
    %v1590 = vmul.f32 %v1585, %v517
    %v1591 = vmul.f32 %v1589, %v517
    %v1592 = vmul.f32 %v1585, %v522
    %v1593 = vmul.f32 %v1589, %v522
    %v1594 = vmul.f32 %v1585, %v527
    %v1595 = vmul.f32 %v1589, %v527
    %v1596 = vmul.f32 %v1585, %v532
    %v1597 = vmul.f32 %v1589, %v532
    %v1598 = vadd.f32 %v1560, %v1590
    %v1599 = vadd.f32 %v1562, %v1591
    %v1600 = vadd.f32 %v1566, %v1592
    %v1601 = vadd.f32 %v1568, %v1593
    %v1602 = vadd.f32 %v1572, %v1594
    %v1603 = vadd.f32 %v1574, %v1595
    %v1604 = vadd.f32 %v1578, %v1596
    %v1605 = vadd.f32 %v1580, %v1597
    %v1606 = vtanh.pop %v1598
    %v1607 = vtanh.pop %v1599
    %v1608 = vtanh.pop %v1600
    %v1609 = vtanh.pop %v1601
    %v1610 = vtanh.pop %v1602
    %v1611 = vtanh.pop %v1603
    %v1612 = vtanh.pop %v1604
    %v1613 = vtanh.pop %v1605
    %1614 = vmatprep.subr.mxu0 %v1607
    %1615 = vmatpush1.msra.mxu0 %v1606
    %1616 = vmatprep.subr.mxu0 %v1609
    %1617 = vmatpush1.msra.mxu0 %v1608
    %1618 = vmatprep.subr.mxu0 %v1611
    %1619 = vmatpush1.msra.mxu0 %v1610
    %1620 = vmatprep.subr.mxu0 %v1613
    %1621 = vmatpush1.msra.mxu0 %v1612
    %1622 = vmatprep.subr.mxu0 %v1440
    %1623 = vmatpush1.msra.mxu0 %v1439
    %1624 = vmatprep.subr.mxu0 %v1442
    %1625 = vmatpush1.msra.mxu0 %v1441
    %1626 = vmatprep.subr.mxu0 %v1444
    %1627 = vmatpush1.msra.mxu0 %v1443
    %1628 = vmatprep.subr.mxu0 %v1446
    %1629 = vmatpush1.msra.mxu0 %v1445
    %1630 = vmatprep.subr.mxu0 0.0
    %1631 = vmatpush1.msra.mxu0 0.0
    %1632 = vmatprep.subr.mxu0 0.0
    %1633 = vmatpush1.msra.mxu0 0.0
    %1634 = vmatprep.subr.mxu0 0.0
    %1635 = vmatpush1.msra.mxu0 0.0
    %1636 = vmatprep.subr.mxu0 0.0
    %1637 = vmatpush1.msra.mxu0 0.0
    %1638 = vmatprep.subr.mxu0 0.0
    %1639 = vmatpush1.msra.mxu0 0.0
    %1640 = vmatprep.subr.mxu0 0.0
    %1641 = vmatpush1.msra.mxu0 0.0
    %1642 = vmatprep.subr.mxu0 0.0
    %1643 = vmatpush1.msra.mxu0 0.0
    %1644 = vmatprep.subr.mxu0 0.0
    %1645 = vmatpush1.msra.mxu0 0.0
    %1646 = vmatprep.subr.mxu0 0.0
    %1647 = vmatpush1.msra.mxu0 0.0
    %1648 = vmatprep.subr.mxu0 0.0
    %1649 = vmatpush1.msra.mxu0 0.0
    %1650 = vmatprep.subr.mxu0 0.0
    %1651 = vmatpush1.msra.mxu0 0.0
    %1652 = vmatprep.subr.mxu0 0.0
    %1653 = vmatpush1.msra.mxu0 0.0
    %1654 = vmatprep.subr.mxu0 0.0
    %1655 = vmatpush1.msra.mxu0 0.0
    %1656 = vmatprep.subr.mxu0 0.0
    %1657 = vmatpush1.msra.mxu0 0.0
    %1658 = vmatprep.subr.mxu0 0.0
    %1659 = vmatpush1.msra.mxu0 0.0
    %1660 = vmatprep.subr.mxu0 0.0
    %1661 = vmatpush1.msra.mxu0 0.0
    %1662 = vmatprep.subr.mxu0 0.0
    %1663 = vmatpush1.msra.mxu0 0.0
    %1664 = vmatprep.subr.mxu0 0.0
    %1665 = vmatpush1.msra.mxu0 0.0
    %1666 = vmatprep.subr.mxu0 0.0
    %1667 = vmatpush1.msra.mxu0 0.0
    %1668 = vmatprep.subr.mxu0 0.0
    %1669 = vmatpush1.msra.mxu0 0.0
    %1670 = vmatprep.subr.mxu0 0.0
    %1671 = vmatpush1.msra.mxu0 0.0
    %1672 = vmatprep.subr.mxu0 0.0
    %1673 = vmatpush1.msra.mxu0 0.0
    %1674 = vmatprep.subr.mxu0 0.0
    %1675 = vmatpush1.msra.mxu0 0.0
    %1676 = vmatprep.subr.mxu0 0.0
    %1677 = vmatpush1.msra.mxu0 0.0
    %1678 = vmatprep.mubr.f32.mxu0 0.0
    %1679 = vmatmul.mubr.f32.gmra.mrb[0].mxu0 %v222
    %v1680 = vpop.f32.mrb[0].mxu0
    %v1681 = vadd.f32 %v203, %v1680
    %v1682 = vpop.f32.mrb[0].mxu0
    %v1683 = vadd.f32 %v203, %v1682
    %1684 = vmatprep.mubr.f32.mxu0 0.0
    %1685 = vmatmul.mubr.f32.gmra.mrb[0].mxu0 %v225
    %v1686 = vpop.f32.mrb[0].mxu0
    %v1687 = vadd.f32 %v208, %v1686
    %v1688 = vpop.f32.mrb[0].mxu0
    %v1689 = vadd.f32 %v208, %v1688
    %1690 = vmatprep.mubr.f32.mxu0 0.0
    %1691 = vmatmul.mubr.f32.gmra.mrb[0].mxu0 %v228
    %v1692 = vpop.f32.mrb[0].mxu0
    %v1693 = vadd.f32 %v213, %v1692
    %v1694 = vpop.f32.mrb[0].mxu0
    %v1695 = vadd.f32 %v213, %v1694
    %1696 = vmatprep.mubr.f32.mxu0 0.0
    %1697 = vmatmul.mubr.f32.gmra.mrb[0].mxu0 %v231
    %v1698 = vpop.f32.mrb[0].mxu0
    %v1699 = vadd.f32 %v218, %v1698
    %v1700 = vpop.f32.mrb[0].mxu0
    %v1701 = vadd.f32 %v218, %v1700
    %1702 = vdwg.mxu0
    %v1703 = vtanh.pop %v1681
    %v1704 = vtanh.pop %v1683
    %v1705 = vtanh.pop %v1687
    %v1706 = vtanh.pop %v1689
    %v1707 = vtanh.pop %v1693
    %v1708 = vtanh.pop %v1695
    %v1709 = vtanh.pop %v1699
    %v1710 = vtanh.pop %v1701
    %v1711 = vmul.f32 %v1703, %v333
    %v1712 = vmul.f32 %v1704, %v333
    %v1713 = vmul.f32 %v1705, %v338
    %v1714 = vmul.f32 %v1706, %v338
    %v1715 = vmul.f32 %v1707, %v343
    %v1716 = vmul.f32 %v1708, %v343
    %v1717 = vmul.f32 %v1709, %v348
    %v1718 = vmul.f32 %v1710, %v348
    %v1719 = vadd.f32 %v1711, %v1713
    %v1720 = vadd.f32 %v1719, %v1715
    %v1721 = vadd.f32 %v1720, %v1717
    %v1722 = vrot.slane %v1721, 4
    %v1723 = vadd.f32 %v1721, %v1722
    %v1724 = vrot.slane %v1723, 2
    %v1725 = vadd.f32 %v1723, %v1724
    %v1726 = vrot.slane %v1725, 1
    %v1727 = vadd.f32 %v1725, %v1726
    %v1728 = vadd.f32 %v1712, %v1714
    %v1729 = vadd.f32 %v1728, %v1716
    %v1730 = vadd.f32 %v1729, %v1718
    %v1731 = vrot.slane %v1730, 4
    %v1732 = vadd.f32 %v1730, %v1731
    %v1733 = vrot.slane %v1732, 2
    %v1734 = vadd.f32 %v1732, %v1733
    %v1735 = vrot.slane %v1734, 1
    %v1736 = vadd.f32 %v1734, %v1735
    %v1737 = vadd.f32 %v1727, %v384
    %v1738 = vadd.f32 %v1736, %v384
    %v1739 = vmul.f32 %v68, %v1737
    %v1740 = vmul.f32 %v69, %v1738
    %v1741 = vmul.f32 %v1739, 0.5
    %v1742 = vmul.f32 %v1740, 0.5
    %v1743 = vtanh.pop %v1741
    %v1744 = vtanh.pop %v1742
    %v1745 = vadd.f32 %v1743, 1.0
    %v1746 = vadd.f32 %v1744, 1.0
    %v1747 = vmul.f32 %v1745, 0.5
    %v1748 = vmul.f32 %v1746, 0.5
    %v1751 = vrot.slane %v1747, 5
    %v1752 = vrot.slane %v1748, 5
    %v1755 = vmul.f32 %v1491, %v1751
    %v1756 = vmul.f32 %v1492, %v1752
    %1757 = vmatprep.subr.mxu0 %v1607
    %1758 = vmatpush1.msra.mxu0 %v1606
    %1759 = vmatprep.subr.mxu0 %v1609
    %1760 = vmatpush1.msra.mxu0 %v1608
    %1761 = vmatprep.subr.mxu0 %v1611
    %1762 = vmatpush1.msra.mxu0 %v1610
    %1763 = vmatprep.subr.mxu0 %v1613
    %1764 = vmatpush1.msra.mxu0 %v1612
    %1765 = vmatprep.subr.mxu0 0.0
    %1766 = vmatpush1.msra.mxu0 0.0
    %1767 = vmatprep.subr.mxu0 0.0
    %1768 = vmatpush1.msra.mxu0 0.0
    %1769 = vmatprep.subr.mxu0 0.0
    %1770 = vmatpush1.msra.mxu0 0.0
    %1771 = vmatprep.subr.mxu0 0.0
    %1772 = vmatpush1.msra.mxu0 0.0
    %1773 = vmatprep.subr.mxu0 0.0
    %1774 = vmatpush1.msra.mxu0 0.0
    %1775 = vmatprep.subr.mxu0 0.0
    %1776 = vmatpush1.msra.mxu0 0.0
    %1777 = vmatprep.subr.mxu0 0.0
    %1778 = vmatpush1.msra.mxu0 0.0
    %1779 = vmatprep.subr.mxu0 0.0
    %1780 = vmatpush1.msra.mxu0 0.0
    %1781 = vmatprep.subr.mxu0 0.0
    %1782 = vmatpush1.msra.mxu0 0.0
    %1783 = vmatprep.subr.mxu0 0.0
    %1784 = vmatpush1.msra.mxu0 0.0
    %1785 = vmatprep.subr.mxu0 0.0
    %1786 = vmatpush1.msra.mxu0 0.0
    %1787 = vmatprep.subr.mxu0 0.0
    %1788 = vmatpush1.msra.mxu0 0.0
    %1789 = vmatprep.subr.mxu0 0.0
    %1790 = vmatpush1.msra.mxu0 0.0
    %1791 = vmatprep.subr.mxu0 0.0
    %1792 = vmatpush1.msra.mxu0 0.0
    %1793 = vmatprep.subr.mxu0 0.0
    %1794 = vmatpush1.msra.mxu0 0.0
    %1795 = vmatprep.subr.mxu0 0.0
    %1796 = vmatpush1.msra.mxu0 0.0
    %1797 = vmatprep.subr.mxu0 0.0
    %1798 = vmatpush1.msra.mxu0 0.0
    %1799 = vmatprep.subr.mxu0 0.0
    %1800 = vmatpush1.msra.mxu0 0.0
    %1801 = vmatprep.subr.mxu0 0.0
    %1802 = vmatpush1.msra.mxu0 0.0
    %1803 = vmatprep.subr.mxu0 0.0
    %1804 = vmatpush1.msra.mxu0 0.0
    %1805 = vmatprep.subr.mxu0 0.0
    %1806 = vmatpush1.msra.mxu0 0.0
    %1807 = vmatprep.subr.mxu0 0.0
    %1808 = vmatpush1.msra.mxu0 0.0
    %1809 = vmatprep.subr.mxu0 0.0
    %1810 = vmatpush1.msra.mxu0 0.0
    %1811 = vmatprep.subr.mxu0 0.0
    %1812 = vmatpush1.msra.mxu0 0.0
    %1813 = vmatprep.subr.mxu0 0.0
    %1814 = vmatpush1.msra.mxu0 0.0
    %1815 = vmatprep.subr.mxu0 0.0
    %1816 = vmatpush1.msra.mxu0 0.0
    %1817 = vmatprep.subr.mxu0 0.0
    %1818 = vmatpush1.msra.mxu0 0.0
    %1819 = vmatprep.subr.mxu0 0.0
    %1820 = vmatpush1.msra.mxu0 0.0
    %1821 = vmatprep.mubr.f32.mxu0 0.0
    %1822 = vmatmul.mubr.f32.gmra.mrb[0].mxu0 %v92
    %v1823 = vpop.f32.mrb[0].mxu0
    %v1824 = vadd.f32 %v400, %v1823
    %v1825 = vpop.f32.mrb[0].mxu0
    %v1826 = vadd.f32 %v400, %v1825
    %1827 = vmatprep.mubr.f32.mxu0 0.0
    %1828 = vmatmul.mubr.f32.gmra.mrb[0].mxu0 %v95
    %v1829 = vpop.f32.mrb[0].mxu0
    %v1830 = vadd.f32 %v405, %v1829
    %v1831 = vpop.f32.mrb[0].mxu0
    %v1832 = vadd.f32 %v405, %v1831
    %1833 = vmatprep.mubr.f32.mxu0 0.0
    %1834 = vmatmul.mubr.f32.gmra.mrb[0].mxu0 %v98
    %v1835 = vpop.f32.mrb[0].mxu0
    %v1836 = vadd.f32 %v410, %v1835
    %v1837 = vpop.f32.mrb[0].mxu0
    %v1838 = vadd.f32 %v410, %v1837
    %1839 = vmatprep.mubr.f32.mxu0 0.0
    %1840 = vmatmul.mubr.f32.gmra.mrb[0].mxu0 %v101
    %v1841 = vpop.f32.mrb[0].mxu0
    %v1842 = vadd.f32 %v415, %v1841
    %v1843 = vpop.f32.mrb[0].mxu0
    %v1844 = vadd.f32 %v415, %v1843
    %1845 = vdwg.mxu0
    %v1846 = vlaneseq
    %v1847 = vshrl.u32 %v1846, 7
    %v1848 = vsub.s32 5, %v1847
    %v1849 = vrot.slane %v64, %v1848
    %v1850 = vlaneseq
    %v1851 = vshrl.u32 %v1850, 7
    %v1852 = vsub.s32 5, %v1851
    %v1853 = vrot.slane %v65, %v1852
    %v1854 = vmul.f32 %v1849, %v517
    %v1855 = vmul.f32 %v1853, %v517
    %v1856 = vmul.f32 %v1849, %v522
    %v1857 = vmul.f32 %v1853, %v522
    %v1858 = vmul.f32 %v1849, %v527
    %v1859 = vmul.f32 %v1853, %v527
    %v1860 = vmul.f32 %v1849, %v532
    %v1861 = vmul.f32 %v1853, %v532
    %v1862 = vadd.f32 %v1824, %v1854
    %v1863 = vadd.f32 %v1826, %v1855
    %v1864 = vadd.f32 %v1830, %v1856
    %v1865 = vadd.f32 %v1832, %v1857
    %v1866 = vadd.f32 %v1836, %v1858
    %v1867 = vadd.f32 %v1838, %v1859
    %v1868 = vadd.f32 %v1842, %v1860
    %v1869 = vadd.f32 %v1844, %v1861
    %v1870 = vtanh.pop %v1862
    %v1871 = vtanh.pop %v1863
    %v1872 = vtanh.pop %v1864
    %v1873 = vtanh.pop %v1865
    %v1874 = vtanh.pop %v1866
    %v1875 = vtanh.pop %v1867
    %v1876 = vtanh.pop %v1868
    %v1877 = vtanh.pop %v1869
    %1878 = vmatprep.subr.mxu0 %v1871
    %1879 = vmatpush1.msra.mxu0 %v1870
    %1880 = vmatprep.subr.mxu0 %v1873
    %1881 = vmatpush1.msra.mxu0 %v1872
    %1882 = vmatprep.subr.mxu0 %v1875
    %1883 = vmatpush1.msra.mxu0 %v1874
    %1884 = vmatprep.subr.mxu0 %v1877
    %1885 = vmatpush1.msra.mxu0 %v1876
    %1886 = vmatprep.subr.mxu0 %v1704
    %1887 = vmatpush1.msra.mxu0 %v1703
    %1888 = vmatprep.subr.mxu0 %v1706
    %1889 = vmatpush1.msra.mxu0 %v1705
    %1890 = vmatprep.subr.mxu0 %v1708
    %1891 = vmatpush1.msra.mxu0 %v1707
    %1892 = vmatprep.subr.mxu0 %v1710
    %1893 = vmatpush1.msra.mxu0 %v1709
    %1894 = vmatprep.subr.mxu0 0.0
    %1895 = vmatpush1.msra.mxu0 0.0
    %1896 = vmatprep.subr.mxu0 0.0
    %1897 = vmatpush1.msra.mxu0 0.0
    %1898 = vmatprep.subr.mxu0 0.0
    %1899 = vmatpush1.msra.mxu0 0.0
    %1900 = vmatprep.subr.mxu0 0.0
    %1901 = vmatpush1.msra.mxu0 0.0
    %1902 = vmatprep.subr.mxu0 0.0
    %1903 = vmatpush1.msra.mxu0 0.0
    %1904 = vmatprep.subr.mxu0 0.0
    %1905 = vmatpush1.msra.mxu0 0.0
    %1906 = vmatprep.subr.mxu0 0.0
    %1907 = vmatpush1.msra.mxu0 0.0
    %1908 = vmatprep.subr.mxu0 0.0
    %1909 = vmatpush1.msra.mxu0 0.0
    %1910 = vmatprep.subr.mxu0 0.0
    %1911 = vmatpush1.msra.mxu0 0.0
    %1912 = vmatprep.subr.mxu0 0.0
    %1913 = vmatpush1.msra.mxu0 0.0
    %1914 = vmatprep.subr.mxu0 0.0
    %1915 = vmatpush1.msra.mxu0 0.0
    %1916 = vmatprep.subr.mxu0 0.0
    %1917 = vmatpush1.msra.mxu0 0.0
    %1918 = vmatprep.subr.mxu0 0.0
    %1919 = vmatpush1.msra.mxu0 0.0
    %1920 = vmatprep.subr.mxu0 0.0
    %1921 = vmatpush1.msra.mxu0 0.0
    %1922 = vmatprep.subr.mxu0 0.0
    %1923 = vmatpush1.msra.mxu0 0.0
    %1924 = vmatprep.subr.mxu0 0.0
    %1925 = vmatpush1.msra.mxu0 0.0
    %1926 = vmatprep.subr.mxu0 0.0
    %1927 = vmatpush1.msra.mxu0 0.0
    %1928 = vmatprep.subr.mxu0 0.0
    %1929 = vmatpush1.msra.mxu0 0.0
    %1930 = vmatprep.subr.mxu0 0.0
    %1931 = vmatpush1.msra.mxu0 0.0
    %1932 = vmatprep.subr.mxu0 0.0
    %1933 = vmatpush1.msra.mxu0 0.0
    %1934 = vmatprep.subr.mxu0 0.0
    %1935 = vmatpush1.msra.mxu0 0.0
    %1936 = vmatprep.subr.mxu0 0.0
    %1937 = vmatpush1.msra.mxu0 0.0
    %1938 = vmatprep.subr.mxu0 0.0
    %1939 = vmatpush1.msra.mxu0 0.0
    %1940 = vmatprep.subr.mxu0 0.0
    %1941 = vmatpush1.msra.mxu0 0.0
    %1942 = vmatprep.mubr.f32.mxu0 0.0
    %1943 = vmatmul.mubr.f32.gmra.mrb[0].mxu0 %v222
    %v1944 = vpop.f32.mrb[0].mxu0
    %v1945 = vadd.f32 %v203, %v1944
    %v1946 = vpop.f32.mrb[0].mxu0
    %v1947 = vadd.f32 %v203, %v1946
    %1948 = vmatprep.mubr.f32.mxu0 0.0
    %1949 = vmatmul.mubr.f32.gmra.mrb[0].mxu0 %v225
    %v1950 = vpop.f32.mrb[0].mxu0
    %v1951 = vadd.f32 %v208, %v1950
    %v1952 = vpop.f32.mrb[0].mxu0
    %v1953 = vadd.f32 %v208, %v1952
    %1954 = vmatprep.mubr.f32.mxu0 0.0
    %1955 = vmatmul.mubr.f32.gmra.mrb[0].mxu0 %v228
    %v1956 = vpop.f32.mrb[0].mxu0
    %v1957 = vadd.f32 %v213, %v1956
    %v1958 = vpop.f32.mrb[0].mxu0
    %v1959 = vadd.f32 %v213, %v1958
    %1960 = vmatprep.mubr.f32.mxu0 0.0
    %1961 = vmatmul.mubr.f32.gmra.mrb[0].mxu0 %v231
    %v1962 = vpop.f32.mrb[0].mxu0
    %v1963 = vadd.f32 %v218, %v1962
    %v1964 = vpop.f32.mrb[0].mxu0
    %v1965 = vadd.f32 %v218, %v1964
    %1966 = vdwg.mxu0
    %v1967 = vtanh.pop %v1945
    %v1968 = vtanh.pop %v1947
    %v1969 = vtanh.pop %v1951
    %v1970 = vtanh.pop %v1953
    %v1971 = vtanh.pop %v1957
    %v1972 = vtanh.pop %v1959
    %v1973 = vtanh.pop %v1963
    %v1974 = vtanh.pop %v1965
    %v1975 = vmul.f32 %v1967, %v333
    %v1976 = vmul.f32 %v1968, %v333
    %v1977 = vmul.f32 %v1969, %v338
    %v1978 = vmul.f32 %v1970, %v338
    %v1979 = vmul.f32 %v1971, %v343
    %v1980 = vmul.f32 %v1972, %v343
    %v1981 = vmul.f32 %v1973, %v348
    %v1982 = vmul.f32 %v1974, %v348
    %v1983 = vadd.f32 %v1975, %v1977
    %v1984 = vadd.f32 %v1983, %v1979
    %v1985 = vadd.f32 %v1984, %v1981
    %v1986 = vrot.slane %v1985, 4
    %v1987 = vadd.f32 %v1985, %v1986
    %v1988 = vrot.slane %v1987, 2
    %v1989 = vadd.f32 %v1987, %v1988
    %v1990 = vrot.slane %v1989, 1
    %v1991 = vadd.f32 %v1989, %v1990
    %v1992 = vadd.f32 %v1976, %v1978
    %v1993 = vadd.f32 %v1992, %v1980
    %v1994 = vadd.f32 %v1993, %v1982
    %v1995 = vrot.slane %v1994, 4
    %v1996 = vadd.f32 %v1994, %v1995
    %v1997 = vrot.slane %v1996, 2
    %v1998 = vadd.f32 %v1996, %v1997
    %v1999 = vrot.slane %v1998, 1
    %v2000 = vadd.f32 %v1998, %v1999
    %v2001 = vadd.f32 %v1991, %v384
    %v2002 = vadd.f32 %v2000, %v384
    %v2003 = vmul.f32 %v68, %v2001
    %v2004 = vmul.f32 %v69, %v2002
    %v2005 = vmul.f32 %v2003, 0.5
    %v2006 = vmul.f32 %v2004, 0.5
    %v2007 = vtanh.pop %v2005
    %v2008 = vtanh.pop %v2006
    %v2009 = vadd.f32 %v2007, 1.0
    %v2010 = vadd.f32 %v2008, 1.0
    %v2011 = vmul.f32 %v2009, 0.5
    %v2012 = vmul.f32 %v2010, 0.5
    %v2015 = vrot.slane %v2011, 6
    %v2016 = vrot.slane %v2012, 6
    %v2019 = vmul.f32 %v1755, %v2015
    %v2020 = vmul.f32 %v1756, %v2016
    %2021 = vmatprep.subr.mxu0 %v1871
    %2022 = vmatpush1.msra.mxu0 %v1870
    %2023 = vmatprep.subr.mxu0 %v1873
    %2024 = vmatpush1.msra.mxu0 %v1872
    %2025 = vmatprep.subr.mxu0 %v1875
    %2026 = vmatpush1.msra.mxu0 %v1874
    %2027 = vmatprep.subr.mxu0 %v1877
    %2028 = vmatpush1.msra.mxu0 %v1876
    %2029 = vmatprep.subr.mxu0 0.0
    %2030 = vmatpush1.msra.mxu0 0.0
    %2031 = vmatprep.subr.mxu0 0.0
    %2032 = vmatpush1.msra.mxu0 0.0
    %2033 = vmatprep.subr.mxu0 0.0
    %2034 = vmatpush1.msra.mxu0 0.0
    %2035 = vmatprep.subr.mxu0 0.0
    %2036 = vmatpush1.msra.mxu0 0.0
    %2037 = vmatprep.subr.mxu0 0.0
    %2038 = vmatpush1.msra.mxu0 0.0
    %2039 = vmatprep.subr.mxu0 0.0
    %2040 = vmatpush1.msra.mxu0 0.0
    %2041 = vmatprep.subr.mxu0 0.0
    %2042 = vmatpush1.msra.mxu0 0.0
    %2043 = vmatprep.subr.mxu0 0.0
    %2044 = vmatpush1.msra.mxu0 0.0
    %2045 = vmatprep.subr.mxu0 0.0
    %2046 = vmatpush1.msra.mxu0 0.0
    %2047 = vmatprep.subr.mxu0 0.0
    %2048 = vmatpush1.msra.mxu0 0.0
    %2049 = vmatprep.subr.mxu0 0.0
    %2050 = vmatpush1.msra.mxu0 0.0
    %2051 = vmatprep.subr.mxu0 0.0
    %2052 = vmatpush1.msra.mxu0 0.0
    %2053 = vmatprep.subr.mxu0 0.0
    %2054 = vmatpush1.msra.mxu0 0.0
    %2055 = vmatprep.subr.mxu0 0.0
    %2056 = vmatpush1.msra.mxu0 0.0
    %2057 = vmatprep.subr.mxu0 0.0
    %2058 = vmatpush1.msra.mxu0 0.0
    %2059 = vmatprep.subr.mxu0 0.0
    %2060 = vmatpush1.msra.mxu0 0.0
    %2061 = vmatprep.subr.mxu0 0.0
    %2062 = vmatpush1.msra.mxu0 0.0
    %2063 = vmatprep.subr.mxu0 0.0
    %2064 = vmatpush1.msra.mxu0 0.0
    %2065 = vmatprep.subr.mxu0 0.0
    %2066 = vmatpush1.msra.mxu0 0.0
    %2067 = vmatprep.subr.mxu0 0.0
    %2068 = vmatpush1.msra.mxu0 0.0
    %2069 = vmatprep.subr.mxu0 0.0
    %2070 = vmatpush1.msra.mxu0 0.0
    %2071 = vmatprep.subr.mxu0 0.0
    %2072 = vmatpush1.msra.mxu0 0.0
    %2073 = vmatprep.subr.mxu0 0.0
    %2074 = vmatpush1.msra.mxu0 0.0
    %2075 = vmatprep.subr.mxu0 0.0
    %2076 = vmatpush1.msra.mxu0 0.0
    %2077 = vmatprep.subr.mxu0 0.0
    %2078 = vmatpush1.msra.mxu0 0.0
    %2079 = vmatprep.subr.mxu0 0.0
    %2080 = vmatpush1.msra.mxu0 0.0
    %2081 = vmatprep.subr.mxu0 0.0
    %2082 = vmatpush1.msra.mxu0 0.0
    %2083 = vmatprep.subr.mxu0 0.0
    %2084 = vmatpush1.msra.mxu0 0.0
    %2085 = vmatprep.mubr.f32.mxu0 0.0
    %2086 = vmatmul.mubr.f32.gmra.mrb[0].mxu0 %v92
    %v2087 = vpop.f32.mrb[0].mxu0
    %v2088 = vadd.f32 %v400, %v2087
    %v2089 = vpop.f32.mrb[0].mxu0
    %v2090 = vadd.f32 %v400, %v2089
    %2091 = vmatprep.mubr.f32.mxu0 0.0
    %2092 = vmatmul.mubr.f32.gmra.mrb[0].mxu0 %v95
    %v2093 = vpop.f32.mrb[0].mxu0
    %v2094 = vadd.f32 %v405, %v2093
    %v2095 = vpop.f32.mrb[0].mxu0
    %v2096 = vadd.f32 %v405, %v2095
    %2097 = vmatprep.mubr.f32.mxu0 0.0
    %2098 = vmatmul.mubr.f32.gmra.mrb[0].mxu0 %v98
    %v2099 = vpop.f32.mrb[0].mxu0
    %v2100 = vadd.f32 %v410, %v2099
    %v2101 = vpop.f32.mrb[0].mxu0
    %v2102 = vadd.f32 %v410, %v2101
    %2103 = vmatprep.mubr.f32.mxu0 0.0
    %2104 = vmatmul.mubr.f32.gmra.mrb[0].mxu0 %v101
    %v2105 = vpop.f32.mrb[0].mxu0
    %v2106 = vadd.f32 %v415, %v2105
    %v2107 = vpop.f32.mrb[0].mxu0
    %v2108 = vadd.f32 %v415, %v2107
    %2109 = vdwg.mxu0
    %v2110 = vlaneseq
    %v2111 = vshrl.u32 %v2110, 7
    %v2112 = vsub.s32 6, %v2111
    %v2113 = vrot.slane %v64, %v2112
    %v2114 = vlaneseq
    %v2115 = vshrl.u32 %v2114, 7
    %v2116 = vsub.s32 6, %v2115
    %v2117 = vrot.slane %v65, %v2116
    %v2118 = vmul.f32 %v2113, %v517
    %v2119 = vmul.f32 %v2117, %v517
    %v2120 = vmul.f32 %v2113, %v522
    %v2121 = vmul.f32 %v2117, %v522
    %v2122 = vmul.f32 %v2113, %v527
    %v2123 = vmul.f32 %v2117, %v527
    %v2124 = vmul.f32 %v2113, %v532
    %v2125 = vmul.f32 %v2117, %v532
    %v2126 = vadd.f32 %v2088, %v2118
    %v2127 = vadd.f32 %v2090, %v2119
    %v2128 = vadd.f32 %v2094, %v2120
    %v2129 = vadd.f32 %v2096, %v2121
    %v2130 = vadd.f32 %v2100, %v2122
    %v2131 = vadd.f32 %v2102, %v2123
    %v2132 = vadd.f32 %v2106, %v2124
    %v2133 = vadd.f32 %v2108, %v2125
    %v2134 = vtanh.pop %v2126
    %v2135 = vtanh.pop %v2127
    %v2136 = vtanh.pop %v2128
    %v2137 = vtanh.pop %v2129
    %v2138 = vtanh.pop %v2130
    %v2139 = vtanh.pop %v2131
    %v2140 = vtanh.pop %v2132
    %v2141 = vtanh.pop %v2133
    %2142 = vmatprep.subr.mxu0 %v2135
    %2143 = vmatpush1.msra.mxu0 %v2134
    %2144 = vmatprep.subr.mxu0 %v2137
    %2145 = vmatpush1.msra.mxu0 %v2136
    %2146 = vmatprep.subr.mxu0 %v2139
    %2147 = vmatpush1.msra.mxu0 %v2138
    %2148 = vmatprep.subr.mxu0 %v2141
    %2149 = vmatpush1.msra.mxu0 %v2140
    %2150 = vmatprep.subr.mxu0 %v1968
    %2151 = vmatpush1.msra.mxu0 %v1967
    %2152 = vmatprep.subr.mxu0 %v1970
    %2153 = vmatpush1.msra.mxu0 %v1969
    %2154 = vmatprep.subr.mxu0 %v1972
    %2155 = vmatpush1.msra.mxu0 %v1971
    %2156 = vmatprep.subr.mxu0 %v1974
    %2157 = vmatpush1.msra.mxu0 %v1973
    %2158 = vmatprep.subr.mxu0 0.0
    %2159 = vmatpush1.msra.mxu0 0.0
    %2160 = vmatprep.subr.mxu0 0.0
    %2161 = vmatpush1.msra.mxu0 0.0
    %2162 = vmatprep.subr.mxu0 0.0
    %2163 = vmatpush1.msra.mxu0 0.0
    %2164 = vmatprep.subr.mxu0 0.0
    %2165 = vmatpush1.msra.mxu0 0.0
    %2166 = vmatprep.subr.mxu0 0.0
    %2167 = vmatpush1.msra.mxu0 0.0
    %2168 = vmatprep.subr.mxu0 0.0
    %2169 = vmatpush1.msra.mxu0 0.0
    %2170 = vmatprep.subr.mxu0 0.0
    %2171 = vmatpush1.msra.mxu0 0.0
    %2172 = vmatprep.subr.mxu0 0.0
    %2173 = vmatpush1.msra.mxu0 0.0
    %2174 = vmatprep.subr.mxu0 0.0
    %2175 = vmatpush1.msra.mxu0 0.0
    %2176 = vmatprep.subr.mxu0 0.0
    %2177 = vmatpush1.msra.mxu0 0.0
    %2178 = vmatprep.subr.mxu0 0.0
    %2179 = vmatpush1.msra.mxu0 0.0
    %2180 = vmatprep.subr.mxu0 0.0
    %2181 = vmatpush1.msra.mxu0 0.0
    %2182 = vmatprep.subr.mxu0 0.0
    %2183 = vmatpush1.msra.mxu0 0.0
    %2184 = vmatprep.subr.mxu0 0.0
    %2185 = vmatpush1.msra.mxu0 0.0
    %2186 = vmatprep.subr.mxu0 0.0
    %2187 = vmatpush1.msra.mxu0 0.0
    %2188 = vmatprep.subr.mxu0 0.0
    %2189 = vmatpush1.msra.mxu0 0.0
    %2190 = vmatprep.subr.mxu0 0.0
    %2191 = vmatpush1.msra.mxu0 0.0
    %2192 = vmatprep.subr.mxu0 0.0
    %2193 = vmatpush1.msra.mxu0 0.0
    %2194 = vmatprep.subr.mxu0 0.0
    %2195 = vmatpush1.msra.mxu0 0.0
    %2196 = vmatprep.subr.mxu0 0.0
    %2197 = vmatpush1.msra.mxu0 0.0
    %2198 = vmatprep.subr.mxu0 0.0
    %2199 = vmatpush1.msra.mxu0 0.0
    %2200 = vmatprep.subr.mxu0 0.0
    %2201 = vmatpush1.msra.mxu0 0.0
    %2202 = vmatprep.subr.mxu0 0.0
    %2203 = vmatpush1.msra.mxu0 0.0
    %2204 = vmatprep.subr.mxu0 0.0
    %2205 = vmatpush1.msra.mxu0 0.0
    %2206 = vmatprep.mubr.f32.mxu0 0.0
    %2207 = vmatmul.mubr.f32.gmra.mrb[0].mxu0 %v222
    %v2208 = vpop.f32.mrb[0].mxu0
    %v2209 = vadd.f32 %v203, %v2208
    %v2210 = vpop.f32.mrb[0].mxu0
    %v2211 = vadd.f32 %v203, %v2210
    %2212 = vmatprep.mubr.f32.mxu0 0.0
    %2213 = vmatmul.mubr.f32.gmra.mrb[0].mxu0 %v225
    %v2214 = vpop.f32.mrb[0].mxu0
    %v2215 = vadd.f32 %v208, %v2214
    %v2216 = vpop.f32.mrb[0].mxu0
    %v2217 = vadd.f32 %v208, %v2216
    %2218 = vmatprep.mubr.f32.mxu0 0.0
    %2219 = vmatmul.mubr.f32.gmra.mrb[0].mxu0 %v228
    %v2220 = vpop.f32.mrb[0].mxu0
    %v2221 = vadd.f32 %v213, %v2220
    %v2222 = vpop.f32.mrb[0].mxu0
    %v2223 = vadd.f32 %v213, %v2222
    %2224 = vmatprep.mubr.f32.mxu0 0.0
    %2225 = vmatmul.mubr.f32.gmra.mrb[0].mxu0 %v231
    %v2226 = vpop.f32.mrb[0].mxu0
    %v2227 = vadd.f32 %v218, %v2226
    %v2228 = vpop.f32.mrb[0].mxu0
    %v2229 = vadd.f32 %v218, %v2228
    %2230 = vdwg.mxu0
    %v2231 = vtanh.pop %v2209
    %v2232 = vtanh.pop %v2211
    %v2233 = vtanh.pop %v2215
    %v2234 = vtanh.pop %v2217
    %v2235 = vtanh.pop %v2221
    %v2236 = vtanh.pop %v2223
    %v2237 = vtanh.pop %v2227
    %v2238 = vtanh.pop %v2229
    %v2239 = vmul.f32 %v2231, %v333
    %v2240 = vmul.f32 %v2232, %v333
    %v2241 = vmul.f32 %v2233, %v338
    %v2242 = vmul.f32 %v2234, %v338
    %v2243 = vmul.f32 %v2235, %v343
    %v2244 = vmul.f32 %v2236, %v343
    %v2245 = vmul.f32 %v2237, %v348
    %v2246 = vmul.f32 %v2238, %v348
    %v2247 = vadd.f32 %v2239, %v2241
    %v2248 = vadd.f32 %v2247, %v2243
    %v2249 = vadd.f32 %v2248, %v2245
    %v2250 = vrot.slane %v2249, 4
    %v2251 = vadd.f32 %v2249, %v2250
    %v2252 = vrot.slane %v2251, 2
    %v2253 = vadd.f32 %v2251, %v2252
    %v2254 = vrot.slane %v2253, 1
    %v2255 = vadd.f32 %v2253, %v2254
    %v2256 = vadd.f32 %v2240, %v2242
    %v2257 = vadd.f32 %v2256, %v2244
    %v2258 = vadd.f32 %v2257, %v2246
    %v2259 = vrot.slane %v2258, 4
    %v2260 = vadd.f32 %v2258, %v2259
    %v2261 = vrot.slane %v2260, 2
    %v2262 = vadd.f32 %v2260, %v2261
    %v2263 = vrot.slane %v2262, 1
    %v2264 = vadd.f32 %v2262, %v2263
    %v2265 = vadd.f32 %v2255, %v384
    %v2266 = vadd.f32 %v2264, %v384
    %v2267 = vmul.f32 %v68, %v2265
    %v2268 = vmul.f32 %v69, %v2266
    %v2269 = vmul.f32 %v2267, 0.5
    %v2270 = vmul.f32 %v2268, 0.5
    %v2271 = vtanh.pop %v2269
    %v2272 = vtanh.pop %v2270
    %v2273 = vadd.f32 %v2271, 1.0
    %v2274 = vadd.f32 %v2272, 1.0
    %v2275 = vmul.f32 %v2273, 0.5
    %v2276 = vmul.f32 %v2274, 0.5
    %v2279 = vrot.slane %v2275, 7
    %v2280 = vrot.slane %v2276, 7
    %v2283 = vmul.f32 %v2019, %v2279
    %v2284 = vmul.f32 %v2020, %v2280
    %v2287 = vcombine.low %v2283, %v2284
    %v2289 = vunpack.c.l.s4 1966171168
    %v2290 = vunpack.c.0.s8 %v2289
    %v2291 = vlaneseq
    %v2292 = vshrl.u32 %v2291, 7
    %v2293 = vsub.s32 %v2290, %v2292
    %v2294 = vrot.slane %v2287, %v2293
    %v2296 = vunpack.c.l.s4 1966171168
    %v2297 = vunpack.c.0.s8 %v2296
    %v2298 = vlaneseq
    %v2299 = vshrl.u32 %v2298, 7
    %v2300 = vsub.s32 %v2297, %v2299
    %v2301 = vrot.slane %v2294, %v2300
    %v2303 = vlaneseq
    %vm2304 = vcmp.ge.s32.totalorder %v2303, 0
    %vm2305 = vcmp.lt.s32.totalorder %v2303, 256
    %vm2306 = vmand %vm2304, %vm2305
    %2307 = vst.msk [vmem:[#allocation3] sm:$0x3] %vm2306, %v2301
    // Predicated region
    $region38: #{tpu_custom_call.1} parent=1 // pred_check
      _
    $region39: #{tpu_custom_call.1} parent=1 // pred_check_branch
      %2309 = sbr.rel (0) target = $region41
    $region40: #{tpu_custom_call.1} parent=1 // pred_region
      %s2311 = ssub.s32 32, 32
      %2312 = vsyncadd [#allocation4], %s2311
      %s2314 = sshll.u32 [#allocation3], 4
      %s2315 = int_to_ptr.vmem [resolvable:$true] %s2314
      %2317 = dma.vmem_to_hbm [thread:$0]  %s2315, 32, %s9, [#allocation4]
    $region41: #{tpu_custom_call.1} parent=1 // pred_fallthru
      _
    // Predicated region
    $region42: #{tpu_custom_call.1} parent=1 // pred_check
      _
    $region43: #{tpu_custom_call.1} parent=1 // pred_check_branch
      %2319 = sbr.rel (0) target = $region45
    $region44: #{tpu_custom_call.1} parent=1 // pred_region
      %2320 = dma.done [#allocation4], 32
    $region45: #{tpu_custom_call.1} parent=1 // pred_fallthru
      _
    %2321 = vsyncpa [#allocation4], 1

</llo_original>
